<compile_context>
chip_gen: v5e
topology: v5e:2x2
jax: 0.10.0
libtpu: 0.0.40
codegen_flags: <defaults>
</compile_context>

<pallas_src>
import functools

import jax
import jax.numpy as jnp
import numpy as np
from jax.experimental import pallas as pl
from jax.experimental.pallas import tpu as pltpu


# ----------------------------- Pallas kernel -----------------------------------
def _build_lstm_fc_kernel(num_layers: int, seq_len: int, batch: int, hidden: int):
    T, B, H = seq_len, batch, hidden

    def kernel(*refs):
        # refs: x_flat, (wih_T, whh_T, b)*num_layers, wfc_T, bfc, out, proj_sc, hseq_sc
        x_ref = refs[0]                                 # (T*B, D_in)  time-major rows
        layer_refs = refs[1 : 1 + 3 * num_layers]
        wfc_ref = refs[1 + 3 * num_layers]              # (H, O)
        bfc_ref = refs[2 + 3 * num_layers]              # (1, O)
        out_ref = refs[3 + 3 * num_layers]              # (B, O)
        proj_sc = refs[4 + 3 * num_layers]              # (T*B, 4H) per-layer gate projections
        hseq_sc = refs[5 + 3 * num_layers]              # (T*B, H)  inter-layer hidden sequence

        h = None
        for layer in range(num_layers):
            # Hoisted weight/bias loads: one vld set per layer, reused by every timestep.
            wih = layer_refs[3 * layer][...]        # (D_l, 4H)
            whh = layer_refs[3 * layer + 1][...]    # (H,   4H)
            b = layer_refs[3 * layer + 2][...]      # (1,   4H) = b_ih + b_hh

            # One batched input projection for all timesteps of this layer.
            inp_seq = x_ref[...] if layer == 0 else hseq_sc[...]   # (T*B, D_l)
            proj_sc[...] = (
                jnp.dot(inp_seq, wih, preferred_element_type=jnp.float32) + b
            )

            last_layer = layer == num_layers - 1
            h = jnp.zeros((B, H), jnp.float32)
            c = jnp.zeros((B, H), jnp.float32)

            # Fully unrolled time loop (T is small & static): only the recurrent
            # h @ W_hh matmul + elementwise cell update remain serial.
            for t in range(T):
                gates = proj_sc[t * B : (t + 1) * B, :] + jnp.dot(
                    h, whh, preferred_element_type=jnp.float32
                )                                        # (B, 4H)
                sig = jax.nn.sigmoid(gates)              # one full-tile EUP pass
                tnh = jnp.tanh(gates)                    # one full-tile EUP pass
                i_g = sig[:, 0 * H : 1 * H]
                f_g = sig[:, 1 * H : 2 * H]
                g_g = tnh[:, 2 * H : 3 * H]
                o_g = sig[:, 3 * H : 4 * H]
                c = f_g * c + i_g * g_g
                h = o_g * jnp.tanh(c)
                if not last_layer:
                    hseq_sc[t * B : (t + 1) * B, :] = h  # feed next layer

        # fc(out[:, -1, :]) == fc(h of top layer at last timestep)
        out_ref[...] = (
            jnp.dot(h, wfc_ref[...], preferred_element_type=jnp.float32) + bfc_ref[...]
        ).astype(out_ref.dtype)

    return kernel


# ----------------------------- wrapper -----------------------------------------
@functools.partial(jax.jit, static_argnames=("num_layers", "hidden_size", "output_size"))
def task_config_forward(x, params, *, num_layers, hidden_size, output_size):
    """x: (batch, seq, input) float32 -> (batch, output_size) float32."""
    B, T, D = x.shape
    # Time-major flattened rows: row index = t*B + b (so a timestep is a contiguous row group).
    x_flat = jnp.transpose(x, (1, 0, 2)).reshape(T * B, D)

    kernel_inputs = [x_flat]
    for layer in range(num_layers):
        wih, whh, b = params["lstm"][layer]
        kernel_inputs += [wih, whh, b]
    kernel_inputs += [params["fc_w"], params["fc_b"]]

    kernel = _build_lstm_fc_kernel(num_layers, T, B, hidden_size)

    vmem_spec = pl.BlockSpec(memory_space=pltpu.MemorySpace.VMEM)
    out = pl.pallas_call(
        kernel,
        out_shape=jax.ShapeDtypeStruct((B, output_size), jnp.float32),
        in_specs=[vmem_spec] * len(kernel_inputs),
        out_specs=vmem_spec,
        scratch_shapes=[
            pltpu.VMEM((T * B, 4 * hidden_size), jnp.float32),  # per-layer gate projections
            pltpu.VMEM((T * B, hidden_size), jnp.float32),      # inter-layer hidden sequence
        ],
    )(*kernel_inputs)
    return out


# ----------------------------- parameter init ----------------------------------
def init_params(key, input_size, hidden_size, num_layers, output_size):
    """PyTorch-style uniform(-1/sqrt(H), 1/sqrt(H)) init; weights stored pre-transposed."""
    k = 1.0 / np.sqrt(hidden_size)
    params = {"lstm": []}
    for layer in range(num_layers):
        d_in = input_size if layer == 0 else hidden_size
        key, k1, k2, k3, k4 = jax.random.split(key, 5)
        w_ih = jax.random.uniform(k1, (4 * hidden_size, d_in), jnp.float32, -k, k)
        w_hh = jax.random.uniform(k2, (4 * hidden_size, hidden_size), jnp.float32, -k, k)
        b_ih = jax.random.uniform(k3, (4 * hidden_size,), jnp.float32, -k, k)
        b_hh = jax.random.uniform(k4, (4 * hidden_size,), jnp.float32, -k, k)
        params["lstm"].append(
            (w_ih.T, w_hh.T, (b_ih + b_hh).reshape(1, 4 * hidden_size))
        )
    key, k5, k6 = jax.random.split(key, 3)
    fc_w = jax.random.uniform(k5, (output_size, hidden_size), jnp.float32, -k, k)
    fc_b = jax.random.uniform(k6, (output_size,), jnp.float32, -k, k)
    params["fc_w"] = fc_w.T
    params["fc_b"] = fc_b.reshape(1, output_size)
    return params


# ----------------------------- pure-JAX reference -------------------------------
def reference_forward(x, params, num_layers, hidden_size):
    B, T, _ = x.shape
    H = hidden_size
    h = [jnp.zeros((B, H), jnp.float32) for _ in range(num_layers)]
    c = [jnp.zeros((B, H), jnp.float32) for _ in range(num_layers)]
    for t in range(T):
        inp = x[:, t, :]
        for layer in range(num_layers):
            wih, whh, b = params["lstm"][layer]
            g = inp @ wih + h[layer] @ whh + b
            i_g = jax.nn.sigmoid(g[:, 0 * H : 1 * H])
            f_g = jax.nn.sigmoid(g[:, 1 * H : 2 * H])
            g_g = jnp.tanh(g[:, 2 * H : 3 * H])
            o_g = jax.nn.sigmoid(g[:, 3 * H : 4 * H])
            c[layer] = f_g * c[layer] + i_g * g_g
            h[layer] = o_g * jnp.tanh(c[layer])
            inp = h[layer]
    return h[num_layers - 1] @ params["fc_w"] + params["fc_b"]


# ----------------------------- main ---------------------------------------------
if __name__ == "__main__":
    input_size, hidden_size, num_layers, output_size = 16, 32, 2, 8
    batch, seq = 2, 8

    key = jax.random.PRNGKey(0)
    key, xkey = jax.random.split(key)
    x = jax.random.normal(xkey, (batch, seq, input_size), jnp.float32)
    params = init_params(key, input_size, hidden_size, num_layers, output_size)

    out = task_config_forward(
        x, params,
        num_layers=num_layers, hidden_size=hidden_size, output_size=output_size,
    )
    out = jax.block_until_ready(out)

    ref = reference_forward(x, params, num_layers, hidden_size)
    np.testing.assert_allclose(np.asarray(out), np.asarray(ref), atol=1e-5, rtol=1e-5)

    print("KERNEL_OK")
</pallas_src>

<mosaic_0001>
module attributes {stable_mosaic.version = 11 : i64} {
  func.func @kernel(%arg0: memref<16x16xf32, #tpu.memory_space<vmem>>, %arg1: memref<16x128xf32, #tpu.memory_space<vmem>>, %arg2: memref<32x128xf32, #tpu.memory_space<vmem>>, %arg3: memref<1x128xf32, #tpu.memory_space<vmem>>, %arg4: memref<32x128xf32, #tpu.memory_space<vmem>>, %arg5: memref<32x128xf32, #tpu.memory_space<vmem>>, %arg6: memref<1x128xf32, #tpu.memory_space<vmem>>, %arg7: memref<32x8xf32, #tpu.memory_space<vmem>>, %arg8: memref<1x8xf32, #tpu.memory_space<vmem>>, %arg9: memref<2x8xf32, #tpu.memory_space<vmem>>, %arg10: memref<16x128xf32, #tpu.memory_space<vmem>>, %arg11: memref<16x32xf32, #tpu.memory_space<vmem>>) attributes {dimension_semantics = [], scalar_prefetch = 0 : i64, scratch_operands = 2 : i64, tpu.core_type = #tpu.core_type<tc>} {
    %c0 = arith.constant 0 : index
    %c0_0 = arith.constant 0 : index
    %0 = vector.load %arg1[%c0, %c0_0] : memref<16x128xf32, #tpu.memory_space<vmem>>, vector<16x128xf32>
    %c0_1 = arith.constant 0 : index
    %c0_2 = arith.constant 0 : index
    %1 = vector.load %arg2[%c0_1, %c0_2] : memref<32x128xf32, #tpu.memory_space<vmem>>, vector<32x128xf32>
    %c0_3 = arith.constant 0 : index
    %c0_4 = arith.constant 0 : index
    %2 = vector.load %arg3[%c0_3, %c0_4] : memref<1x128xf32, #tpu.memory_space<vmem>>, vector<1x128xf32>
    %c0_5 = arith.constant 0 : index
    %c0_6 = arith.constant 0 : index
    %3 = vector.load %arg0[%c0_5, %c0_6] : memref<16x16xf32, #tpu.memory_space<vmem>>, vector<16x16xf32>
    %cst = arith.constant dense<0.000000e+00> : vector<16x128xf32>
    %4 = tpu.matmul %3, %0, %cst {dimension_numbers = #tpu.dot_dimension_numbers<[1], [0], [0], [1], [0, 0, 1, 1], [], []>} : vector<16x16xf32>, vector<16x128xf32>, vector<16x128xf32> -> vector<16x128xf32>
    %5 = vector.broadcast %2 : vector<1x128xf32> to vector<16x128xf32>
    %6 = arith.addf %4, %5 : vector<16x128xf32>
    %c0_7 = arith.constant 0 : index
    %c0_8 = arith.constant 0 : index
    %7 = vector.load %arg10[%c0_7, %c0_8] : memref<16x128xf32, #tpu.memory_space<vmem>>, vector<16x128xf32>
    tpu.vector_store %arg10[%c0_7, %c0_8], %6 {strides = array<i32>} : memref<16x128xf32, #tpu.memory_space<vmem>>, vector<16x128xf32>,
    %cst_9 = arith.constant 0.000000e+00 : f32
    %8 = vector.broadcast %cst_9 : f32 to vector<2x32xf32>
    %cst_10 = arith.constant 0.000000e+00 : f32
    %9 = vector.broadcast %cst_10 : f32 to vector<2x32xf32>
    %c0_11 = arith.constant 0 : index
    %c0_12 = arith.constant 0 : index
    %10 = vector.load %arg10[%c0_11, %c0_12] : memref<16x128xf32, #tpu.memory_space<vmem>>, vector<2x128xf32>
    %cst_13 = arith.constant dense<0.000000e+00> : vector<2x128xf32>
    %11 = tpu.matmul %8, %1, %cst_13 {dimension_numbers = #tpu.dot_dimension_numbers<[1], [0], [0], [1], [0, 0, 1, 1], [], []>} : vector<2x32xf32>, vector<32x128xf32>, vector<2x128xf32> -> vector<2x128xf32>
    %12 = arith.addf %10, %11 : vector<2x128xf32>
    %13 = arith.negf %12 : vector<2x128xf32>
    %14 = math.exp %13 : vector<2x128xf32>
    %cst_14 = arith.constant 1.000000e+00 : f32
    %15 = vector.broadcast %cst_14 : f32 to vector<2x128xf32>
    %16 = arith.addf %15, %14 : vector<2x128xf32>
    %17 = arith.divf %15, %16 : vector<2x128xf32>
    %18 = math.tanh %12 : vector<2x128xf32>
    %19 = vector.extract_strided_slice %17 {offsets = [0, 0], sizes = [2, 32], strides = [1, 1]} : vector<2x128xf32> to vector<2x32xf32>
    %20 = vector.extract_strided_slice %17 {offsets = [0, 32], sizes = [2, 32], strides = [1, 1]} : vector<2x128xf32> to vector<2x32xf32>
    %21 = vector.extract_strided_slice %18 {offsets = [0, 64], sizes = [2, 32], strides = [1, 1]} : vector<2x128xf32> to vector<2x32xf32>
    %22 = vector.extract_strided_slice %17 {offsets = [0, 96], sizes = [2, 32], strides = [1, 1]} : vector<2x128xf32> to vector<2x32xf32>
    %23 = arith.mulf %20, %9 : vector<2x32xf32>
    %24 = arith.mulf %19, %21 : vector<2x32xf32>
    %25 = arith.addf %23, %24 : vector<2x32xf32>
    %26 = math.tanh %25 : vector<2x32xf32>
    %27 = arith.mulf %22, %26 : vector<2x32xf32>
    %c0_15 = arith.constant 0 : index
    %c0_16 = arith.constant 0 : index
    %28 = vector.load %arg11[%c0_15, %c0_16] : memref<16x32xf32, #tpu.memory_space<vmem>>, vector<2x32xf32>
    tpu.vector_store %arg11[%c0_15, %c0_16], %27 {strides = array<i32>} : memref<16x32xf32, #tpu.memory_space<vmem>>, vector<2x32xf32>,
    %c2 = arith.constant 2 : index
    %c0_17 = arith.constant 0 : index
    %29 = vector.load %arg10[%c2, %c0_17] : memref<16x128xf32, #tpu.memory_space<vmem>>, vector<2x128xf32>
    %cst_18 = arith.constant dense<0.000000e+00> : vector<2x128xf32>
    %30 = tpu.matmul %27, %1, %cst_18 {dimension_numbers = #tpu.dot_dimension_numbers<[1], [0], [0], [1], [0, 0, 1, 1], [], []>} : vector<2x32xf32>, vector<32x128xf32>, vector<2x128xf32> -> vector<2x128xf32>
    %31 = arith.addf %29, %30 : vector<2x128xf32>
    %32 = arith.negf %31 : vector<2x128xf32>
    %33 = math.exp %32 : vector<2x128xf32>
    %cst_19 = arith.constant 1.000000e+00 : f32
    %34 = vector.broadcast %cst_19 : f32 to vector<2x128xf32>
    %35 = arith.addf %34, %33 : vector<2x128xf32>
    %36 = arith.divf %34, %35 : vector<2x128xf32>
    %37 = math.tanh %31 : vector<2x128xf32>
    %38 = vector.extract_strided_slice %36 {offsets = [0, 0], sizes = [2, 32], strides = [1, 1]} : vector<2x128xf32> to vector<2x32xf32>
    %39 = vector.extract_strided_slice %36 {offsets = [0, 32], sizes = [2, 32], strides = [1, 1]} : vector<2x128xf32> to vector<2x32xf32>
    %40 = vector.extract_strided_slice %37 {offsets = [0, 64], sizes = [2, 32], strides = [1, 1]} : vector<2x128xf32> to vector<2x32xf32>
    %41 = vector.extract_strided_slice %36 {offsets = [0, 96], sizes = [2, 32], strides = [1, 1]} : vector<2x128xf32> to vector<2x32xf32>
    %42 = arith.mulf %39, %25 : vector<2x32xf32>
    %43 = arith.mulf %38, %40 : vector<2x32xf32>
    %44 = arith.addf %42, %43 : vector<2x32xf32>
    %45 = math.tanh %44 : vector<2x32xf32>
    %46 = arith.mulf %41, %45 : vector<2x32xf32>
    %c2_20 = arith.constant 2 : index
    %c0_21 = arith.constant 0 : index
    %47 = vector.load %arg11[%c2_20, %c0_21] : memref<16x32xf32, #tpu.memory_space<vmem>>, vector<2x32xf32>
    tpu.vector_store %arg11[%c2_20, %c0_21], %46 {strides = array<i32>} : memref<16x32xf32, #tpu.memory_space<vmem>>, vector<2x32xf32>,
    %c4 = arith.constant 4 : index
    %c0_22 = arith.constant 0 : index
    %48 = vector.load %arg10[%c4, %c0_22] : memref<16x128xf32, #tpu.memory_space<vmem>>, vector<2x128xf32>
    %cst_23 = arith.constant dense<0.000000e+00> : vector<2x128xf32>
    %49 = tpu.matmul %46, %1, %cst_23 {dimension_numbers = #tpu.dot_dimension_numbers<[1], [0], [0], [1], [0, 0, 1, 1], [], []>} : vector<2x32xf32>, vector<32x128xf32>, vector<2x128xf32> -> vector<2x128xf32>
    %50 = arith.addf %48, %49 : vector<2x128xf32>
    %51 = arith.negf %50 : vector<2x128xf32>
    %52 = math.exp %51 : vector<2x128xf32>
    %cst_24 = arith.constant 1.000000e+00 : f32
    %53 = vector.broadcast %cst_24 : f32 to vector<2x128xf32>
    %54 = arith.addf %53, %52 : vector<2x128xf32>
    %55 = arith.divf %53, %54 : vector<2x128xf32>
    %56 = math.tanh %50 : vector<2x128xf32>
    %57 = vector.extract_strided_slice %55 {offsets = [0, 0], sizes = [2, 32], strides = [1, 1]} : vector<2x128xf32> to vector<2x32xf32>
    %58 = vector.extract_strided_slice %55 {offsets = [0, 32], sizes = [2, 32], strides = [1, 1]} : vector<2x128xf32> to vector<2x32xf32>
    %59 = vector.extract_strided_slice %56 {offsets = [0, 64], sizes = [2, 32], strides = [1, 1]} : vector<2x128xf32> to vector<2x32xf32>
    %60 = vector.extract_strided_slice %55 {offsets = [0, 96], sizes = [2, 32], strides = [1, 1]} : vector<2x128xf32> to vector<2x32xf32>
    %61 = arith.mulf %58, %44 : vector<2x32xf32>
    %62 = arith.mulf %57, %59 : vector<2x32xf32>
    %63 = arith.addf %61, %62 : vector<2x32xf32>
    %64 = math.tanh %63 : vector<2x32xf32>
    %65 = arith.mulf %60, %64 : vector<2x32xf32>
    %c4_25 = arith.constant 4 : index
    %c0_26 = arith.constant 0 : index
    %66 = vector.load %arg11[%c4_25, %c0_26] : memref<16x32xf32, #tpu.memory_space<vmem>>, vector<2x32xf32>
    tpu.vector_store %arg11[%c4_25, %c0_26], %65 {strides = array<i32>} : memref<16x32xf32, #tpu.memory_space<vmem>>, vector<2x32xf32>,
    %c6 = arith.constant 6 : index
    %c0_27 = arith.constant 0 : index
    %67 = vector.load %arg10[%c6, %c0_27] : memref<16x128xf32, #tpu.memory_space<vmem>>, vector<2x128xf32>
    %cst_28 = arith.constant dense<0.000000e+00> : vector<2x128xf32>
    %68 = tpu.matmul %65, %1, %cst_28 {dimension_numbers = #tpu.dot_dimension_numbers<[1], [0], [0], [1], [0, 0, 1, 1], [], []>} : vector<2x32xf32>, vector<32x128xf32>, vector<2x128xf32> -> vector<2x128xf32>
    %69 = arith.addf %67, %68 : vector<2x128xf32>
    %70 = arith.negf %69 : vector<2x128xf32>
    %71 = math.exp %70 : vector<2x128xf32>
    %cst_29 = arith.constant 1.000000e+00 : f32
    %72 = vector.broadcast %cst_29 : f32 to vector<2x128xf32>
    %73 = arith.addf %72, %71 : vector<2x128xf32>
    %74 = arith.divf %72, %73 : vector<2x128xf32>
    %75 = math.tanh %69 : vector<2x128xf32>
    %76 = vector.extract_strided_slice %74 {offsets = [0, 0], sizes = [2, 32], strides = [1, 1]} : vector<2x128xf32> to vector<2x32xf32>
    %77 = vector.extract_strided_slice %74 {offsets = [0, 32], sizes = [2, 32], strides = [1, 1]} : vector<2x128xf32> to vector<2x32xf32>
    %78 = vector.extract_strided_slice %75 {offsets = [0, 64], sizes = [2, 32], strides = [1, 1]} : vector<2x128xf32> to vector<2x32xf32>
    %79 = vector.extract_strided_slice %74 {offsets = [0, 96], sizes = [2, 32], strides = [1, 1]} : vector<2x128xf32> to vector<2x32xf32>
    %80 = arith.mulf %77, %63 : vector<2x32xf32>
    %81 = arith.mulf %76, %78 : vector<2x32xf32>
    %82 = arith.addf %80, %81 : vector<2x32xf32>
    %83 = math.tanh %82 : vector<2x32xf32>
    %84 = arith.mulf %79, %83 : vector<2x32xf32>
    %c6_30 = arith.constant 6 : index
    %c0_31 = arith.constant 0 : index
    %85 = vector.load %arg11[%c6_30, %c0_31] : memref<16x32xf32, #tpu.memory_space<vmem>>, vector<2x32xf32>
    tpu.vector_store %arg11[%c6_30, %c0_31], %84 {strides = array<i32>} : memref<16x32xf32, #tpu.memory_space<vmem>>, vector<2x32xf32>,
    %c8 = arith.constant 8 : index
    %c0_32 = arith.constant 0 : index
    %86 = vector.load %arg10[%c8, %c0_32] : memref<16x128xf32, #tpu.memory_space<vmem>>, vector<2x128xf32>
    %cst_33 = arith.constant dense<0.000000e+00> : vector<2x128xf32>
    %87 = tpu.matmul %84, %1, %cst_33 {dimension_numbers = #tpu.dot_dimension_numbers<[1], [0], [0], [1], [0, 0, 1, 1], [], []>} : vector<2x32xf32>, vector<32x128xf32>, vector<2x128xf32> -> vector<2x128xf32>
    %88 = arith.addf %86, %87 : vector<2x128xf32>
    %89 = arith.negf %88 : vector<2x128xf32>
    %90 = math.exp %89 : vector<2x128xf32>
    %cst_34 = arith.constant 1.000000e+00 : f32
    %91 = vector.broadcast %cst_34 : f32 to vector<2x128xf32>
    %92 = arith.addf %91, %90 : vector<2x128xf32>
    %93 = arith.divf %91, %92 : vector<2x128xf32>
    %94 = math.tanh %88 : vector<2x128xf32>
    %95 = vector.extract_strided_slice %93 {offsets = [0, 0], sizes = [2, 32], strides = [1, 1]} : vector<2x128xf32> to vector<2x32xf32>
    %96 = vector.extract_strided_slice %93 {offsets = [0, 32], sizes = [2, 32], strides = [1, 1]} : vector<2x128xf32> to vector<2x32xf32>
    %97 = vector.extract_strided_slice %94 {offsets = [0, 64], sizes = [2, 32], strides = [1, 1]} : vector<2x128xf32> to vector<2x32xf32>
    %98 = vector.extract_strided_slice %93 {offsets = [0, 96], sizes = [2, 32], strides = [1, 1]} : vector<2x128xf32> to vector<2x32xf32>
    %99 = arith.mulf %96, %82 : vector<2x32xf32>
    %100 = arith.mulf %95, %97 : vector<2x32xf32>
    %101 = arith.addf %99, %100 : vector<2x32xf32>
    %102 = math.tanh %101 : vector<2x32xf32>
    %103 = arith.mulf %98, %102 : vector<2x32xf32>
    %c8_35 = arith.constant 8 : index
    %c0_36 = arith.constant 0 : index
    %104 = vector.load %arg11[%c8_35, %c0_36] : memref<16x32xf32, #tpu.memory_space<vmem>>, vector<2x32xf32>
    tpu.vector_store %arg11[%c8_35, %c0_36], %103 {strides = array<i32>} : memref<16x32xf32, #tpu.memory_space<vmem>>, vector<2x32xf32>,
    %c10 = arith.constant 10 : index
    %c0_37 = arith.constant 0 : index
    %105 = vector.load %arg10[%c10, %c0_37] : memref<16x128xf32, #tpu.memory_space<vmem>>, vector<2x128xf32>
    %cst_38 = arith.constant dense<0.000000e+00> : vector<2x128xf32>
    %106 = tpu.matmul %103, %1, %cst_38 {dimension_numbers = #tpu.dot_dimension_numbers<[1], [0], [0], [1], [0, 0, 1, 1], [], []>} : vector<2x32xf32>, vector<32x128xf32>, vector<2x128xf32> -> vector<2x128xf32>
    %107 = arith.addf %105, %106 : vector<2x128xf32>
    %108 = arith.negf %107 : vector<2x128xf32>
    %109 = math.exp %108 : vector<2x128xf32>
    %cst_39 = arith.constant 1.000000e+00 : f32
    %110 = vector.broadcast %cst_39 : f32 to vector<2x128xf32>
    %111 = arith.addf %110, %109 : vector<2x128xf32>
    %112 = arith.divf %110, %111 : vector<2x128xf32>
    %113 = math.tanh %107 : vector<2x128xf32>
    %114 = vector.extract_strided_slice %112 {offsets = [0, 0], sizes = [2, 32], strides = [1, 1]} : vector<2x128xf32> to vector<2x32xf32>
    %115 = vector.extract_strided_slice %112 {offsets = [0, 32], sizes = [2, 32], strides = [1, 1]} : vector<2x128xf32> to vector<2x32xf32>
    %116 = vector.extract_strided_slice %113 {offsets = [0, 64], sizes = [2, 32], strides = [1, 1]} : vector<2x128xf32> to vector<2x32xf32>
    %117 = vector.extract_strided_slice %112 {offsets = [0, 96], sizes = [2, 32], strides = [1, 1]} : vector<2x128xf32> to vector<2x32xf32>
    %118 = arith.mulf %115, %101 : vector<2x32xf32>
    %119 = arith.mulf %114, %116 : vector<2x32xf32>
    %120 = arith.addf %118, %119 : vector<2x32xf32>
    %121 = math.tanh %120 : vector<2x32xf32>
    %122 = arith.mulf %117, %121 : vector<2x32xf32>
    %c10_40 = arith.constant 10 : index
    %c0_41 = arith.constant 0 : index
    %123 = vector.load %arg11[%c10_40, %c0_41] : memref<16x32xf32, #tpu.memory_space<vmem>>, vector<2x32xf32>
    tpu.vector_store %arg11[%c10_40, %c0_41], %122 {strides = array<i32>} : memref<16x32xf32, #tpu.memory_space<vmem>>, vector<2x32xf32>,
    %c12 = arith.constant 12 : index
    %c0_42 = arith.constant 0 : index
    %124 = vector.load %arg10[%c12, %c0_42] : memref<16x128xf32, #tpu.memory_space<vmem>>, vector<2x128xf32>
    %cst_43 = arith.constant dense<0.000000e+00> : vector<2x128xf32>
    %125 = tpu.matmul %122, %1, %cst_43 {dimension_numbers = #tpu.dot_dimension_numbers<[1], [0], [0], [1], [0, 0, 1, 1], [], []>} : vector<2x32xf32>, vector<32x128xf32>, vector<2x128xf32> -> vector<2x128xf32>
    %126 = arith.addf %124, %125 : vector<2x128xf32>
    %127 = arith.negf %126 : vector<2x128xf32>
    %128 = math.exp %127 : vector<2x128xf32>
    %cst_44 = arith.constant 1.000000e+00 : f32
    %129 = vector.broadcast %cst_44 : f32 to vector<2x128xf32>
    %130 = arith.addf %129, %128 : vector<2x128xf32>
    %131 = arith.divf %129, %130 : vector<2x128xf32>
    %132 = math.tanh %126 : vector<2x128xf32>
    %133 = vector.extract_strided_slice %131 {offsets = [0, 0], sizes = [2, 32], strides = [1, 1]} : vector<2x128xf32> to vector<2x32xf32>
    %134 = vector.extract_strided_slice %131 {offsets = [0, 32], sizes = [2, 32], strides = [1, 1]} : vector<2x128xf32> to vector<2x32xf32>
    %135 = vector.extract_strided_slice %132 {offsets = [0, 64], sizes = [2, 32], strides = [1, 1]} : vector<2x128xf32> to vector<2x32xf32>
    %136 = vector.extract_strided_slice %131 {offsets = [0, 96], sizes = [2, 32], strides = [1, 1]} : vector<2x128xf32> to vector<2x32xf32>
    %137 = arith.mulf %134, %120 : vector<2x32xf32>
    %138 = arith.mulf %133, %135 : vector<2x32xf32>
    %139 = arith.addf %137, %138 : vector<2x32xf32>
    %140 = math.tanh %139 : vector<2x32xf32>
    %141 = arith.mulf %136, %140 : vector<2x32xf32>
    %c12_45 = arith.constant 12 : index
    %c0_46 = arith.constant 0 : index
    %142 = vector.load %arg11[%c12_45, %c0_46] : memref<16x32xf32, #tpu.memory_space<vmem>>, vector<2x32xf32>
    tpu.vector_store %arg11[%c12_45, %c0_46], %141 {strides = array<i32>} : memref<16x32xf32, #tpu.memory_space<vmem>>, vector<2x32xf32>,
    %c14 = arith.constant 14 : index
    %c0_47 = arith.constant 0 : index
    %143 = vector.load %arg10[%c14, %c0_47] : memref<16x128xf32, #tpu.memory_space<vmem>>, vector<2x128xf32>
    %cst_48 = arith.constant dense<0.000000e+00> : vector<2x128xf32>
    %144 = tpu.matmul %141, %1, %cst_48 {dimension_numbers = #tpu.dot_dimension_numbers<[1], [0], [0], [1], [0, 0, 1, 1], [], []>} : vector<2x32xf32>, vector<32x128xf32>, vector<2x128xf32> -> vector<2x128xf32>
    %145 = arith.addf %143, %144 : vector<2x128xf32>
    %146 = arith.negf %145 : vector<2x128xf32>
    %147 = math.exp %146 : vector<2x128xf32>
    %cst_49 = arith.constant 1.000000e+00 : f32
    %148 = vector.broadcast %cst_49 : f32 to vector<2x128xf32>
    %149 = arith.addf %148, %147 : vector<2x128xf32>
    %150 = arith.divf %148, %149 : vector<2x128xf32>
    %151 = math.tanh %145 : vector<2x128xf32>
    %152 = vector.extract_strided_slice %150 {offsets = [0, 0], sizes = [2, 32], strides = [1, 1]} : vector<2x128xf32> to vector<2x32xf32>
    %153 = vector.extract_strided_slice %150 {offsets = [0, 32], sizes = [2, 32], strides = [1, 1]} : vector<2x128xf32> to vector<2x32xf32>
    %154 = vector.extract_strided_slice %151 {offsets = [0, 64], sizes = [2, 32], strides = [1, 1]} : vector<2x128xf32> to vector<2x32xf32>
    %155 = vector.extract_strided_slice %150 {offsets = [0, 96], sizes = [2, 32], strides = [1, 1]} : vector<2x128xf32> to vector<2x32xf32>
    %156 = arith.mulf %153, %139 : vector<2x32xf32>
    %157 = arith.mulf %152, %154 : vector<2x32xf32>
    %158 = arith.addf %156, %157 : vector<2x32xf32>
    %159 = math.tanh %158 : vector<2x32xf32>
    %160 = arith.mulf %155, %159 : vector<2x32xf32>
    %c14_50 = arith.constant 14 : index
    %c0_51 = arith.constant 0 : index
    %161 = vector.load %arg11[%c14_50, %c0_51] : memref<16x32xf32, #tpu.memory_space<vmem>>, vector<2x32xf32>
    tpu.vector_store %arg11[%c14_50, %c0_51], %160 {strides = array<i32>} : memref<16x32xf32, #tpu.memory_space<vmem>>, vector<2x32xf32>,
    %c0_52 = arith.constant 0 : index
    %c0_53 = arith.constant 0 : index
    %162 = vector.load %arg4[%c0_52, %c0_53] : memref<32x128xf32, #tpu.memory_space<vmem>>, vector<32x128xf32>
    %c0_54 = arith.constant 0 : index
    %c0_55 = arith.constant 0 : index
    %163 = vector.load %arg5[%c0_54, %c0_55] : memref<32x128xf32, #tpu.memory_space<vmem>>, vector<32x128xf32>
    %c0_56 = arith.constant 0 : index
    %c0_57 = arith.constant 0 : index
    %164 = vector.load %arg6[%c0_56, %c0_57] : memref<1x128xf32, #tpu.memory_space<vmem>>, vector<1x128xf32>
    %c0_58 = arith.constant 0 : index
    %c0_59 = arith.constant 0 : index
    %165 = vector.load %arg11[%c0_58, %c0_59] : memref<16x32xf32, #tpu.memory_space<vmem>>, vector<16x32xf32>
    %cst_60 = arith.constant dense<0.000000e+00> : vector<16x128xf32>
    %166 = tpu.matmul %165, %162, %cst_60 {dimension_numbers = #tpu.dot_dimension_numbers<[1], [0], [0], [1], [0, 0, 1, 1], [], []>} : vector<16x32xf32>, vector<32x128xf32>, vector<16x128xf32> -> vector<16x128xf32>
    %167 = vector.broadcast %164 : vector<1x128xf32> to vector<16x128xf32>
    %168 = arith.addf %166, %167 : vector<16x128xf32>
    %c0_61 = arith.constant 0 : index
    %c0_62 = arith.constant 0 : index
    %169 = vector.load %arg10[%c0_61, %c0_62] : memref<16x128xf32, #tpu.memory_space<vmem>>, vector<16x128xf32>
    tpu.vector_store %arg10[%c0_61, %c0_62], %168 {strides = array<i32>} : memref<16x128xf32, #tpu.memory_space<vmem>>, vector<16x128xf32>,
    %cst_63 = arith.constant 0.000000e+00 : f32
    %170 = vector.broadcast %cst_63 : f32 to vector<2x32xf32>
    %cst_64 = arith.constant 0.000000e+00 : f32
    %171 = vector.broadcast %cst_64 : f32 to vector<2x32xf32>
    %c0_65 = arith.constant 0 : index
    %c0_66 = arith.constant 0 : index
    %172 = vector.load %arg10[%c0_65, %c0_66] : memref<16x128xf32, #tpu.memory_space<vmem>>, vector<2x128xf32>
    %cst_67 = arith.constant dense<0.000000e+00> : vector<2x128xf32>
    %173 = tpu.matmul %170, %163, %cst_67 {dimension_numbers = #tpu.dot_dimension_numbers<[1], [0], [0], [1], [0, 0, 1, 1], [], []>} : vector<2x32xf32>, vector<32x128xf32>, vector<2x128xf32> -> vector<2x128xf32>
    %174 = arith.addf %172, %173 : vector<2x128xf32>
    %175 = arith.negf %174 : vector<2x128xf32>
    %176 = math.exp %175 : vector<2x128xf32>
    %cst_68 = arith.constant 1.000000e+00 : f32
    %177 = vector.broadcast %cst_68 : f32 to vector<2x128xf32>
    %178 = arith.addf %177, %176 : vector<2x128xf32>
    %179 = arith.divf %177, %178 : vector<2x128xf32>
    %180 = math.tanh %174 : vector<2x128xf32>
    %181 = vector.extract_strided_slice %179 {offsets = [0, 0], sizes = [2, 32], strides = [1, 1]} : vector<2x128xf32> to vector<2x32xf32>
    %182 = vector.extract_strided_slice %179 {offsets = [0, 32], sizes = [2, 32], strides = [1, 1]} : vector<2x128xf32> to vector<2x32xf32>
    %183 = vector.extract_strided_slice %180 {offsets = [0, 64], sizes = [2, 32], strides = [1, 1]} : vector<2x128xf32> to vector<2x32xf32>
    %184 = vector.extract_strided_slice %179 {offsets = [0, 96], sizes = [2, 32], strides = [1, 1]} : vector<2x128xf32> to vector<2x32xf32>
    %185 = arith.mulf %182, %171 : vector<2x32xf32>
    %186 = arith.mulf %181, %183 : vector<2x32xf32>
    %187 = arith.addf %185, %186 : vector<2x32xf32>
    %188 = math.tanh %187 : vector<2x32xf32>
    %189 = arith.mulf %184, %188 : vector<2x32xf32>
    %c2_69 = arith.constant 2 : index
    %c0_70 = arith.constant 0 : index
    %190 = vector.load %arg10[%c2_69, %c0_70] : memref<16x128xf32, #tpu.memory_space<vmem>>, vector<2x128xf32>
    %cst_71 = arith.constant dense<0.000000e+00> : vector<2x128xf32>
    %191 = tpu.matmul %189, %163, %cst_71 {dimension_numbers = #tpu.dot_dimension_numbers<[1], [0], [0], [1], [0, 0, 1, 1], [], []>} : vector<2x32xf32>, vector<32x128xf32>, vector<2x128xf32> -> vector<2x128xf32>
    %192 = arith.addf %190, %191 : vector<2x128xf32>
    %193 = arith.negf %192 : vector<2x128xf32>
    %194 = math.exp %193 : vector<2x128xf32>
    %cst_72 = arith.constant 1.000000e+00 : f32
    %195 = vector.broadcast %cst_72 : f32 to vector<2x128xf32>
    %196 = arith.addf %195, %194 : vector<2x128xf32>
    %197 = arith.divf %195, %196 : vector<2x128xf32>
    %198 = math.tanh %192 : vector<2x128xf32>
    %199 = vector.extract_strided_slice %197 {offsets = [0, 0], sizes = [2, 32], strides = [1, 1]} : vector<2x128xf32> to vector<2x32xf32>
    %200 = vector.extract_strided_slice %197 {offsets = [0, 32], sizes = [2, 32], strides = [1, 1]} : vector<2x128xf32> to vector<2x32xf32>
    %201 = vector.extract_strided_slice %198 {offsets = [0, 64], sizes = [2, 32], strides = [1, 1]} : vector<2x128xf32> to vector<2x32xf32>
    %202 = vector.extract_strided_slice %197 {offsets = [0, 96], sizes = [2, 32], strides = [1, 1]} : vector<2x128xf32> to vector<2x32xf32>
    %203 = arith.mulf %200, %187 : vector<2x32xf32>
    %204 = arith.mulf %199, %201 : vector<2x32xf32>
    %205 = arith.addf %203, %204 : vector<2x32xf32>
    %206 = math.tanh %205 : vector<2x32xf32>
    %207 = arith.mulf %202, %206 : vector<2x32xf32>
    %c4_73 = arith.constant 4 : index
    %c0_74 = arith.constant 0 : index
    %208 = vector.load %arg10[%c4_73, %c0_74] : memref<16x128xf32, #tpu.memory_space<vmem>>, vector<2x128xf32>
    %cst_75 = arith.constant dense<0.000000e+00> : vector<2x128xf32>
    %209 = tpu.matmul %207, %163, %cst_75 {dimension_numbers = #tpu.dot_dimension_numbers<[1], [0], [0], [1], [0, 0, 1, 1], [], []>} : vector<2x32xf32>, vector<32x128xf32>, vector<2x128xf32> -> vector<2x128xf32>
    %210 = arith.addf %208, %209 : vector<2x128xf32>
    %211 = arith.negf %210 : vector<2x128xf32>
    %212 = math.exp %211 : vector<2x128xf32>
    %cst_76 = arith.constant 1.000000e+00 : f32
    %213 = vector.broadcast %cst_76 : f32 to vector<2x128xf32>
    %214 = arith.addf %213, %212 : vector<2x128xf32>
    %215 = arith.divf %213, %214 : vector<2x128xf32>
    %216 = math.tanh %210 : vector<2x128xf32>
    %217 = vector.extract_strided_slice %215 {offsets = [0, 0], sizes = [2, 32], strides = [1, 1]} : vector<2x128xf32> to vector<2x32xf32>
    %218 = vector.extract_strided_slice %215 {offsets = [0, 32], sizes = [2, 32], strides = [1, 1]} : vector<2x128xf32> to vector<2x32xf32>
    %219 = vector.extract_strided_slice %216 {offsets = [0, 64], sizes = [2, 32], strides = [1, 1]} : vector<2x128xf32> to vector<2x32xf32>
    %220 = vector.extract_strided_slice %215 {offsets = [0, 96], sizes = [2, 32], strides = [1, 1]} : vector<2x128xf32> to vector<2x32xf32>
    %221 = arith.mulf %218, %205 : vector<2x32xf32>
    %222 = arith.mulf %217, %219 : vector<2x32xf32>
    %223 = arith.addf %221, %222 : vector<2x32xf32>
    %224 = math.tanh %223 : vector<2x32xf32>
    %225 = arith.mulf %220, %224 : vector<2x32xf32>
    %c6_77 = arith.constant 6 : index
    %c0_78 = arith.constant 0 : index
    %226 = vector.load %arg10[%c6_77, %c0_78] : memref<16x128xf32, #tpu.memory_space<vmem>>, vector<2x128xf32>
    %cst_79 = arith.constant dense<0.000000e+00> : vector<2x128xf32>
    %227 = tpu.matmul %225, %163, %cst_79 {dimension_numbers = #tpu.dot_dimension_numbers<[1], [0], [0], [1], [0, 0, 1, 1], [], []>} : vector<2x32xf32>, vector<32x128xf32>, vector<2x128xf32> -> vector<2x128xf32>
    %228 = arith.addf %226, %227 : vector<2x128xf32>
    %229 = arith.negf %228 : vector<2x128xf32>
    %230 = math.exp %229 : vector<2x128xf32>
    %cst_80 = arith.constant 1.000000e+00 : f32
    %231 = vector.broadcast %cst_80 : f32 to vector<2x128xf32>
    %232 = arith.addf %231, %230 : vector<2x128xf32>
    %233 = arith.divf %231, %232 : vector<2x128xf32>
    %234 = math.tanh %228 : vector<2x128xf32>
    %235 = vector.extract_strided_slice %233 {offsets = [0, 0], sizes = [2, 32], strides = [1, 1]} : vector<2x128xf32> to vector<2x32xf32>
    %236 = vector.extract_strided_slice %233 {offsets = [0, 32], sizes = [2, 32], strides = [1, 1]} : vector<2x128xf32> to vector<2x32xf32>
    %237 = vector.extract_strided_slice %234 {offsets = [0, 64], sizes = [2, 32], strides = [1, 1]} : vector<2x128xf32> to vector<2x32xf32>
    %238 = vector.extract_strided_slice %233 {offsets = [0, 96], sizes = [2, 32], strides = [1, 1]} : vector<2x128xf32> to vector<2x32xf32>
    %239 = arith.mulf %236, %223 : vector<2x32xf32>
    %240 = arith.mulf %235, %237 : vector<2x32xf32>
    %241 = arith.addf %239, %240 : vector<2x32xf32>
    %242 = math.tanh %241 : vector<2x32xf32>
    %243 = arith.mulf %238, %242 : vector<2x32xf32>
    %c8_81 = arith.constant 8 : index
    %c0_82 = arith.constant 0 : index
    %244 = vector.load %arg10[%c8_81, %c0_82] : memref<16x128xf32, #tpu.memory_space<vmem>>, vector<2x128xf32>
    %cst_83 = arith.constant dense<0.000000e+00> : vector<2x128xf32>
    %245 = tpu.matmul %243, %163, %cst_83 {dimension_numbers = #tpu.dot_dimension_numbers<[1], [0], [0], [1], [0, 0, 1, 1], [], []>} : vector<2x32xf32>, vector<32x128xf32>, vector<2x128xf32> -> vector<2x128xf32>
    %246 = arith.addf %244, %245 : vector<2x128xf32>
    %247 = arith.negf %246 : vector<2x128xf32>
    %248 = math.exp %247 : vector<2x128xf32>
    %cst_84 = arith.constant 1.000000e+00 : f32
    %249 = vector.broadcast %cst_84 : f32 to vector<2x128xf32>
    %250 = arith.addf %249, %248 : vector<2x128xf32>
    %251 = arith.divf %249, %250 : vector<2x128xf32>
    %252 = math.tanh %246 : vector<2x128xf32>
    %253 = vector.extract_strided_slice %251 {offsets = [0, 0], sizes = [2, 32], strides = [1, 1]} : vector<2x128xf32> to vector<2x32xf32>
    %254 = vector.extract_strided_slice %251 {offsets = [0, 32], sizes = [2, 32], strides = [1, 1]} : vector<2x128xf32> to vector<2x32xf32>
    %255 = vector.extract_strided_slice %252 {offsets = [0, 64], sizes = [2, 32], strides = [1, 1]} : vector<2x128xf32> to vector<2x32xf32>
    %256 = vector.extract_strided_slice %251 {offsets = [0, 96], sizes = [2, 32], strides = [1, 1]} : vector<2x128xf32> to vector<2x32xf32>
    %257 = arith.mulf %254, %241 : vector<2x32xf32>
    %258 = arith.mulf %253, %255 : vector<2x32xf32>
    %259 = arith.addf %257, %258 : vector<2x32xf32>
    %260 = math.tanh %259 : vector<2x32xf32>
    %261 = arith.mulf %256, %260 : vector<2x32xf32>
    %c10_85 = arith.constant 10 : index
    %c0_86 = arith.constant 0 : index
    %262 = vector.load %arg10[%c10_85, %c0_86] : memref<16x128xf32, #tpu.memory_space<vmem>>, vector<2x128xf32>
    %cst_87 = arith.constant dense<0.000000e+00> : vector<2x128xf32>
    %263 = tpu.matmul %261, %163, %cst_87 {dimension_numbers = #tpu.dot_dimension_numbers<[1], [0], [0], [1], [0, 0, 1, 1], [], []>} : vector<2x32xf32>, vector<32x128xf32>, vector<2x128xf32> -> vector<2x128xf32>
    %264 = arith.addf %262, %263 : vector<2x128xf32>
    %265 = arith.negf %264 : vector<2x128xf32>
    %266 = math.exp %265 : vector<2x128xf32>
    %cst_88 = arith.constant 1.000000e+00 : f32
    %267 = vector.broadcast %cst_88 : f32 to vector<2x128xf32>
    %268 = arith.addf %267, %266 : vector<2x128xf32>
    %269 = arith.divf %267, %268 : vector<2x128xf32>
    %270 = math.tanh %264 : vector<2x128xf32>
    %271 = vector.extract_strided_slice %269 {offsets = [0, 0], sizes = [2, 32], strides = [1, 1]} : vector<2x128xf32> to vector<2x32xf32>
    %272 = vector.extract_strided_slice %269 {offsets = [0, 32], sizes = [2, 32], strides = [1, 1]} : vector<2x128xf32> to vector<2x32xf32>
    %273 = vector.extract_strided_slice %270 {offsets = [0, 64], sizes = [2, 32], strides = [1, 1]} : vector<2x128xf32> to vector<2x32xf32>
    %274 = vector.extract_strided_slice %269 {offsets = [0, 96], sizes = [2, 32], strides = [1, 1]} : vector<2x128xf32> to vector<2x32xf32>
    %275 = arith.mulf %272, %259 : vector<2x32xf32>
    %276 = arith.mulf %271, %273 : vector<2x32xf32>
    %277 = arith.addf %275, %276 : vector<2x32xf32>
    %278 = math.tanh %277 : vector<2x32xf32>
    %279 = arith.mulf %274, %278 : vector<2x32xf32>
    %c12_89 = arith.constant 12 : index
    %c0_90 = arith.constant 0 : index
    %280 = vector.load %arg10[%c12_89, %c0_90] : memref<16x128xf32, #tpu.memory_space<vmem>>, vector<2x128xf32>
    %cst_91 = arith.constant dense<0.000000e+00> : vector<2x128xf32>
    %281 = tpu.matmul %279, %163, %cst_91 {dimension_numbers = #tpu.dot_dimension_numbers<[1], [0], [0], [1], [0, 0, 1, 1], [], []>} : vector<2x32xf32>, vector<32x128xf32>, vector<2x128xf32> -> vector<2x128xf32>
    %282 = arith.addf %280, %281 : vector<2x128xf32>
    %283 = arith.negf %282 : vector<2x128xf32>
    %284 = math.exp %283 : vector<2x128xf32>
    %cst_92 = arith.constant 1.000000e+00 : f32
    %285 = vector.broadcast %cst_92 : f32 to vector<2x128xf32>
    %286 = arith.addf %285, %284 : vector<2x128xf32>
    %287 = arith.divf %285, %286 : vector<2x128xf32>
    %288 = math.tanh %282 : vector<2x128xf32>
    %289 = vector.extract_strided_slice %287 {offsets = [0, 0], sizes = [2, 32], strides = [1, 1]} : vector<2x128xf32> to vector<2x32xf32>
    %290 = vector.extract_strided_slice %287 {offsets = [0, 32], sizes = [2, 32], strides = [1, 1]} : vector<2x128xf32> to vector<2x32xf32>
    %291 = vector.extract_strided_slice %288 {offsets = [0, 64], sizes = [2, 32], strides = [1, 1]} : vector<2x128xf32> to vector<2x32xf32>
    %292 = vector.extract_strided_slice %287 {offsets = [0, 96], sizes = [2, 32], strides = [1, 1]} : vector<2x128xf32> to vector<2x32xf32>
    %293 = arith.mulf %290, %277 : vector<2x32xf32>
    %294 = arith.mulf %289, %291 : vector<2x32xf32>
    %295 = arith.addf %293, %294 : vector<2x32xf32>
    %296 = math.tanh %295 : vector<2x32xf32>
    %297 = arith.mulf %292, %296 : vector<2x32xf32>
    %c14_93 = arith.constant 14 : index
    %c0_94 = arith.constant 0 : index
    %298 = vector.load %arg10[%c14_93, %c0_94] : memref<16x128xf32, #tpu.memory_space<vmem>>, vector<2x128xf32>
    %cst_95 = arith.constant dense<0.000000e+00> : vector<2x128xf32>
    %299 = tpu.matmul %297, %163, %cst_95 {dimension_numbers = #tpu.dot_dimension_numbers<[1], [0], [0], [1], [0, 0, 1, 1], [], []>} : vector<2x32xf32>, vector<32x128xf32>, vector<2x128xf32> -> vector<2x128xf32>
    %300 = arith.addf %298, %299 : vector<2x128xf32>
    %301 = arith.negf %300 : vector<2x128xf32>
    %302 = math.exp %301 : vector<2x128xf32>
    %cst_96 = arith.constant 1.000000e+00 : f32
    %303 = vector.broadcast %cst_96 : f32 to vector<2x128xf32>
    %304 = arith.addf %303, %302 : vector<2x128xf32>
    %305 = arith.divf %303, %304 : vector<2x128xf32>
    %306 = math.tanh %300 : vector<2x128xf32>
    %307 = vector.extract_strided_slice %305 {offsets = [0, 0], sizes = [2, 32], strides = [1, 1]} : vector<2x128xf32> to vector<2x32xf32>
    %308 = vector.extract_strided_slice %305 {offsets = [0, 32], sizes = [2, 32], strides = [1, 1]} : vector<2x128xf32> to vector<2x32xf32>
    %309 = vector.extract_strided_slice %306 {offsets = [0, 64], sizes = [2, 32], strides = [1, 1]} : vector<2x128xf32> to vector<2x32xf32>
    %310 = vector.extract_strided_slice %305 {offsets = [0, 96], sizes = [2, 32], strides = [1, 1]} : vector<2x128xf32> to vector<2x32xf32>
    %311 = arith.mulf %308, %295 : vector<2x32xf32>
    %312 = arith.mulf %307, %309 : vector<2x32xf32>
    %313 = arith.addf %311, %312 : vector<2x32xf32>
    %314 = math.tanh %313 : vector<2x32xf32>
    %315 = arith.mulf %310, %314 : vector<2x32xf32>
    %c0_97 = arith.constant 0 : index
    %c0_98 = arith.constant 0 : index
    %316 = vector.load %arg7[%c0_97, %c0_98] : memref<32x8xf32, #tpu.memory_space<vmem>>, vector<32x8xf32>
    %cst_99 = arith.constant dense<0.000000e+00> : vector<2x8xf32>
    %317 = tpu.matmul %315, %316, %cst_99 {dimension_numbers = #tpu.dot_dimension_numbers<[1], [0], [0], [1], [0, 0, 1, 1], [], []>} : vector<2x32xf32>, vector<32x8xf32>, vector<2x8xf32> -> vector<2x8xf32>
    %c0_100 = arith.constant 0 : index
    %c0_101 = arith.constant 0 : index
    %318 = vector.load %arg8[%c0_100, %c0_101] : memref<1x8xf32, #tpu.memory_space<vmem>>, vector<1x8xf32>
    %319 = vector.broadcast %318 : vector<1x8xf32> to vector<2x8xf32>
    %320 = arith.addf %317, %319 : vector<2x8xf32>
    %c0_102 = arith.constant 0 : index
    %c0_103 = arith.constant 0 : index
    %321 = vector.load %arg9[%c0_102, %c0_103] : memref<2x8xf32, #tpu.memory_space<vmem>>, vector<2x8xf32>
    tpu.vector_store %arg9[%c0_102, %c0_103], %320 {strides = array<i32>} : memref<2x8xf32, #tpu.memory_space<vmem>>, vector<2x8xf32>,
    return
  }
}

</mosaic_0001>

<llo_original>
// kernel: task_config_forward.1
$region0: #{task_config_forward.1}
  #allocation0 [shape = 'u32[]', space=smem, size = 0x4, offset = 0x4, fixed_abs, tag = 'smem constant byte address 0x4 - core index']
  #allocation1 [shape = 'u32[72,128]{1,0:T(1,128)}', space=vmem, size = 0x9000, scoped, tag = 'internal scratch']
  #allocation2 [shape = 'f32[16,128]{1,0:T(8,128)}', space=vmem, size = 0x2000, scoped, tag = 'scratch operand']
  #allocation3 [shape = 'f32[16,32]{1,0:T(8,128)}', space=vmem, size = 0x2000, scoped, tag = 'scratch operand']
  %s0 = inlined_call_operand.vmem [shape: f32[16,16], index: 0, kind: input, shape index: {}]
  %s1 = inlined_call_operand.hbm [shape: f32[16,128], index: 1, kind: input, shape index: {}]
  %s2 = inlined_call_operand.vmem [shape: f32[32,128], index: 2, kind: input, shape index: {}]
  %s3 = inlined_call_operand.vmem [shape: f32[1,128], index: 3, kind: input, shape index: {}]
  %s4 = inlined_call_operand.vmem [shape: f32[32,128], index: 4, kind: input, shape index: {}]
  %s5 = inlined_call_operand.hbm [shape: f32[32,128], index: 5, kind: input, shape index: {}]
  %s6 = inlined_call_operand.vmem [shape: f32[1,128], index: 6, kind: input, shape index: {}]
  %s7 = inlined_call_operand.vmem [shape: f32[32,8], index: 7, kind: input, shape index: {}]
  %s8 = inlined_call_operand.hbm [shape: f32[1,8], index: 8, kind: input, shape index: {}]
  %s9 = inlined_call_operand.hbm [shape: f32[2,8], index: 9, kind: output, shape index: {}]
  %s10 = sld [smem:[#allocation0]]
  $region58: #{task_config_forward.1} parent=0
    _
  %s12 = ssub.s32 1, %s10
  %s13 = scalar_select 0, %s12, %s10
  $region1: #{task_config_forward.1} parent=0
    #allocation4 [shape = 'u8[8192]{0}', space=vmem, size = 0x2000, scoped, tag = 'input window, operand 1, single buffered']
    #allocation5 [shape = 's32[1]{0}', space=sflag, size = 0x4, scoped, tag = 'scoped memory for task_config_forward.1']
    #allocation6 [shape = 's32[1]{0}', space=sflag, size = 0x4, scoped, tag = 'scoped memory for task_config_forward.1']
    #allocation7 [shape = 'u8[16384]{0}', space=vmem, size = 0x4000, scoped, tag = 'input window, operand 5, single buffered']
    #allocation8 [shape = 's32[1]{0}', space=sflag, size = 0x4, scoped, tag = 'scoped memory for task_config_forward.1']
    #allocation9 [shape = 'u8[512]{0}', space=vmem, size = 0x400, scoped, tag = 'input window, operand 8, single buffered']
    #allocation10 [shape = 'u8[1024]{0}', space=vmem, size = 0x400, scoped, tag = 'output window, operand 0, single buffered']
    %14 = vsyncpa [#allocation5], 0
    %15 = vsyncpa [#allocation8], 0
    %16 = vsyncpa [#allocation6], 0
    // Predicated region
    $region2: #{task_config_forward.1} parent=1 // pred_check
      _
    $region3: #{task_config_forward.1} parent=1 // pred_check_branch
      %18 = sbr.rel (0) target = $region5
    $region4: #{task_config_forward.1} parent=1 // pred_region
      _
    $region5: #{task_config_forward.1} parent=1 // pred_fallthru
      _
    // Predicated region
    $region6: #{task_config_forward.1} parent=1 // pred_check
      _
    $region7: #{task_config_forward.1} parent=1 // pred_check_branch
      %20 = sbr.rel (0) target = $region9
    $region8: #{task_config_forward.1} parent=1 // pred_region
      %22 = vsyncadd [#allocation5], 0
      %s23 = sshll.u32 %s1, 4
      %s24 = int_to_ptr.hbm [resolvable:$true] %s23
      %s25 = sshll.u32 [#allocation4], 4
      %s26 = int_to_ptr.vmem [resolvable:$true] %s25
      %31 = dma.hbm_to_vmem [thread:$0]  %s24, 256, %s26, [#allocation5], 128, 128, 8
    $region9: #{task_config_forward.1} parent=1 // pred_fallthru
      _
    // Predicated region
    $region10: #{task_config_forward.1} parent=1 // pred_check
      _
    $region11: #{task_config_forward.1} parent=1 // pred_check_branch
      %33 = sbr.rel (0) target = $region13
    $region12: #{task_config_forward.1} parent=1 // pred_region
      _
    $region13: #{task_config_forward.1} parent=1 // pred_fallthru
      _
    // Predicated region
    $region14: #{task_config_forward.1} parent=1 // pred_check
      _
    $region15: #{task_config_forward.1} parent=1 // pred_check_branch
      %35 = sbr.rel (0) target = $region17
    $region16: #{task_config_forward.1} parent=1 // pred_region
      _
    $region17: #{task_config_forward.1} parent=1 // pred_fallthru
      _
    // Predicated region
    $region18: #{task_config_forward.1} parent=1 // pred_check
      _
    $region19: #{task_config_forward.1} parent=1 // pred_check_branch
      %37 = sbr.rel (0) target = $region21
    $region20: #{task_config_forward.1} parent=1 // pred_region
      _
    $region21: #{task_config_forward.1} parent=1 // pred_fallthru
      _
    // Predicated region
    $region22: #{task_config_forward.1} parent=1 // pred_check
      _
    $region23: #{task_config_forward.1} parent=1 // pred_check_branch
      %39 = sbr.rel (0) target = $region25
    $region24: #{task_config_forward.1} parent=1 // pred_region
      %41 = vsyncadd [#allocation8], 0
      %s42 = sshll.u32 %s5, 4
      %s43 = int_to_ptr.hbm [resolvable:$true] %s42
      %s44 = sshll.u32 [#allocation7], 4
      %s45 = int_to_ptr.vmem [resolvable:$true] %s44
      %50 = dma.hbm_to_vmem [thread:$0]  %s43, 512, %s45, [#allocation8], 128, 128, 8
    $region25: #{task_config_forward.1} parent=1 // pred_fallthru
      _
    // Predicated region
    $region26: #{task_config_forward.1} parent=1 // pred_check
      _
    $region27: #{task_config_forward.1} parent=1 // pred_check_branch
      %52 = sbr.rel (0) target = $region29
    $region28: #{task_config_forward.1} parent=1 // pred_region
      _
    $region29: #{task_config_forward.1} parent=1 // pred_fallthru
      _
    // Predicated region
    $region30: #{task_config_forward.1} parent=1 // pred_check
      _
    $region31: #{task_config_forward.1} parent=1 // pred_check_branch
      %54 = sbr.rel (0) target = $region33
    $region32: #{task_config_forward.1} parent=1 // pred_region
      _
    $region33: #{task_config_forward.1} parent=1 // pred_fallthru
      _
    // Predicated region
    $region34: #{task_config_forward.1} parent=1 // pred_check
      _
    $region35: #{task_config_forward.1} parent=1 // pred_check_branch
      %56 = sbr.rel (0) target = $region37
    $region36: #{task_config_forward.1} parent=1 // pred_region
      %58 = vsyncadd [#allocation8], 0
      %s60 = sshll.u32 %s8, 4
      %s61 = int_to_ptr.hbm [resolvable:$true] %s60
      %s62 = sshll.u32 [#allocation9], 4
      %s63 = int_to_ptr.vmem [resolvable:$true] %s62
      %65 = dma.hbm_to_vmem [thread:$0]  %s61, 16, %s63, [#allocation8]
    $region37: #{task_config_forward.1} parent=1 // pred_fallthru
      _
    // Predicated region
    $region38: #{task_config_forward.1} parent=1 // pred_check
      _
    $region39: #{task_config_forward.1} parent=1 // pred_check_branch
      %67 = sbr.rel (0) target = $region41
    $region40: #{task_config_forward.1} parent=1 // pred_region
      %69 = dma.done [#allocation5], 256
    $region41: #{task_config_forward.1} parent=1 // pred_fallthru
      _
    // Predicated region
    $region42: #{task_config_forward.1} parent=1 // pred_check
      _
    $region43: #{task_config_forward.1} parent=1 // pred_check_branch
      %71 = sbr.rel (0) target = $region45
    $region44: #{task_config_forward.1} parent=1 // pred_region
      %73 = dma.done [#allocation8], 512
    $region45: #{task_config_forward.1} parent=1 // pred_fallthru
      _
    // Predicated region
    $region46: #{task_config_forward.1} parent=1 // pred_check
      _
    $region47: #{task_config_forward.1} parent=1 // pred_check_branch
      %75 = sbr.rel (0) target = $region49
    $region48: #{task_config_forward.1} parent=1 // pred_region
      %77 = dma.done [#allocation8], 16
    $region49: #{task_config_forward.1} parent=1 // pred_fallthru
      _
    %v78 = vld [vmem:[#allocation4] sm:$0xff]
    %v79 = vld [vmem:[#allocation4 + $0x8] sm:$0xff]
    %v80 = vld [vmem:[%s2] sm:$0xff]
    %v81 = vld [vmem:[%s2 + $0x8] sm:$0xff]
    %v82 = vld [vmem:[%s2 + $0x10] sm:$0xff]
    %v83 = vld [vmem:[%s2 + $0x18] sm:$0xff]
    %v84 = vld [vmem:[%s3] sm:$0x1]
    %v85 = vld [vmem:[%s0] sm:$0xff]
    %v86 = vld [vmem:[%s0 + $0x8] sm:$0xff]
    %v88 = vperm.slane %v84, 0
    %vm90 = vcmask 130048
    %v92 = vsel %vm90, %v85, 0
    %v95 = vsel %vm90, %v86, 0
    %97 = vmatpush.msra.mxu0 0.0
    %98 = vmatpush.msra.mxu0 0.0
    %99 = vmatpush.msra.mxu0 0.0
    %100 = vmatpush.msra.mxu0 0.0
    %101 = vmatpush.msra.mxu0 0.0
    %102 = vmatpush.msra.mxu0 0.0
    %103 = vmatpush.msra.mxu0 0.0
    %104 = vmatpush.msra.mxu0 0.0
    %105 = vmatpush.msra.mxu0 0.0
    %106 = vmatpush.msra.mxu0 0.0
    %107 = vmatpush.msra.mxu0 0.0
    %108 = vmatpush.msra.mxu0 0.0
    %109 = vmatpush.msra.mxu0 0.0
    %110 = vmatpush.msra.mxu0 0.0
    %111 = vmatpush.msra.mxu0 %v79
    %112 = vmatpush.msra.mxu0 %v78
    %113 = vmatmul.f32.gmra.mxu0 %v92
    %v114 = vpop.f32.mrf.mxu0
    %v115 = vadd.f32 %v88, %v114
    %116 = vmatmul.f32.gmra.mxu0 %v95
    %v117 = vpop.f32.mrf.mxu0
    %v118 = vadd.f32 %v88, %v117
    %119 = vdwg.mxu0
    %120 = vst [vmem:[#allocation2] sm:$0xff] %v115
    %121 = vst [vmem:[#allocation2 + $0x8] sm:$0xff] %v118
    %v122 = vld [vmem:[#allocation2] sm:$0x3]
    %vm123 = vcmask 261120
    %v125 = vsel %vm123, 0.0, 0
    %127 = vmatpush.msra.mxu0 0.0
    %128 = vmatpush.msra.mxu0 0.0
    %129 = vmatpush.msra.mxu0 0.0
    %130 = vmatpush.msra.mxu0 0.0
    %131 = vmatpush.msra.mxu0 0.0
    %132 = vmatpush.msra.mxu0 0.0
    %133 = vmatpush.msra.mxu0 0.0
    %134 = vmatpush.msra.mxu0 0.0
    %135 = vmatpush.msra.mxu0 0.0
    %136 = vmatpush.msra.mxu0 0.0
    %137 = vmatpush.msra.mxu0 0.0
    %138 = vmatpush.msra.mxu0 0.0
    %139 = vmatpush.msra.mxu0 %v83
    %140 = vmatpush.msra.mxu0 %v82
    %141 = vmatpush.msra.mxu0 %v81
    %142 = vmatpush.msra.mxu0 %v80
    %143 = vmatmul.f32.gmra.mxu0 %v125
    %v144 = vpop.f32.mrf.mxu0
    %v145 = vadd.f32 0.0, %v144
    %146 = vdwg.mxu0
    %v147 = vadd.f32 %v122, %v145
    %v148 = vxor.u32 %v147, 2147483648
    %v149 = vmul.f32 %v148, 1.442695
    %v150 = vpow.pop %v149
    %v151 = vadd.f32 %v150, 1.0
    %v152 = vrcp.pop %v151
    %v153 = vmul.f32 %v151, %v152
    %v154 = vsub.f32 1.0, %v153
    %v155 = vmul.f32 %v152, %v154
    %v156 = vadd.f32 %v152, %v155
    %vm157 = vweird.f32 %v151
    %vm158 = vweird.f32 %v152
    %vm159 = vmor %vm157, %vm158
    %v160 = vsel %vm159, %v152, %v156
    %v161 = vand.u32 2147483647, %v151
    %vm162 = vcmp.eq.f32.partialorder %v161, 8.507059e+37
    %v163 = vand.u32 %v151, 2147483648
    %v164 = vor.u32 1.1754944e-38, %v163
    %v165 = vsel %vm162, %v164, %v160
    %v166 = vmul.f32 1.0, %v165
    %v167 = vtanh.pop %v147
    %v168 = vmul.f32 %v166, 0.0
    %170 = vrot.lane.b32.xlu0 %v167, 64
    %v171 = vpop.permute.xlu0 %170
    %v173 = vmul.f32 %v166, %v171
    %175 = vrot.lane.b32.xlu0 %v173, 32
    %v176 = vpop.permute.xlu0 %175
    %v178 = vadd.f32 %v168, %v176
    %v179 = vtanh.pop %v178
    %181 = vrot.lane.b32.xlu0 %v179, 64
    %v182 = vpop.permute.xlu0 %181
    %v184 = vmul.f32 %v166, %v182
    %186 = vrot.lane.b32.xlu0 %v184, 32
    %v187 = vpop.permute.xlu0 %186
    %vm189 = vcmask 254976
    %190 = vst.msk [vmem:[#allocation3] sm:$0x3] %vm189, %v187
    %v191 = vld [vmem:[#allocation2 + $0x2] sm:$0x3]
    %v192 = vsel %vm123, %v187, 0
    %194 = vmatpush.msra.mxu0 0.0
    %195 = vmatpush.msra.mxu0 0.0
    %196 = vmatpush.msra.mxu0 0.0
    %197 = vmatpush.msra.mxu0 0.0
    %198 = vmatpush.msra.mxu0 0.0
    %199 = vmatpush.msra.mxu0 0.0
    %200 = vmatpush.msra.mxu0 0.0
    %201 = vmatpush.msra.mxu0 0.0
    %202 = vmatpush.msra.mxu0 0.0
    %203 = vmatpush.msra.mxu0 0.0
    %204 = vmatpush.msra.mxu0 0.0
    %205 = vmatpush.msra.mxu0 0.0
    %206 = vmatpush.msra.mxu0 %v83
    %207 = vmatpush.msra.mxu0 %v82
    %208 = vmatpush.msra.mxu0 %v81
    %209 = vmatpush.msra.mxu0 %v80
    %210 = vmatmul.f32.gmra.mxu0 %v192
    %v211 = vpop.f32.mrf.mxu0
    %v212 = vadd.f32 0.0, %v211
    %213 = vdwg.mxu0
    %v214 = vadd.f32 %v191, %v212
    %v215 = vxor.u32 %v214, 2147483648
    %v216 = vmul.f32 %v215, 1.442695
    %v217 = vpow.pop %v216
    %v218 = vadd.f32 %v217, 1.0
    %v219 = vrcp.pop %v218
    %v220 = vmul.f32 %v218, %v219
    %v221 = vsub.f32 1.0, %v220
    %v222 = vmul.f32 %v219, %v221
    %v223 = vadd.f32 %v219, %v222
    %vm224 = vweird.f32 %v218
    %vm225 = vweird.f32 %v219
    %vm226 = vmor %vm224, %vm225
    %v227 = vsel %vm226, %v219, %v223
    %v228 = vand.u32 2147483647, %v218
    %vm229 = vcmp.eq.f32.partialorder %v228, 8.507059e+37
    %v230 = vand.u32 %v218, 2147483648
    %v231 = vor.u32 1.1754944e-38, %v230
    %v232 = vsel %vm229, %v231, %v227
    %v233 = vmul.f32 1.0, %v232
    %v234 = vtanh.pop %v214
    %v235 = vmul.f32 %v233, %v178
    %237 = vrot.lane.b32.xlu0 %v234, 64
    %v238 = vpop.permute.xlu0 %237
    %v240 = vmul.f32 %v233, %v238
    %242 = vrot.lane.b32.xlu0 %v240, 32
    %v243 = vpop.permute.xlu0 %242
    %v245 = vadd.f32 %v235, %v243
    %v246 = vtanh.pop %v245
    %248 = vrot.lane.b32.xlu0 %v246, 64
    %v249 = vpop.permute.xlu0 %248
    %v251 = vmul.f32 %v233, %v249
    %253 = vrot.lane.b32.xlu0 %v251, 32
    %v254 = vpop.permute.xlu0 %253
    %256 = vst.msk [vmem:[#allocation3 + $0x2] sm:$0x3] %vm189, %v254
    %v257 = vld [vmem:[#allocation2 + $0x4] sm:$0x3]
    %v258 = vsel %vm123, %v254, 0
    %260 = vmatpush.msra.mxu0 0.0
    %261 = vmatpush.msra.mxu0 0.0
    %262 = vmatpush.msra.mxu0 0.0
    %263 = vmatpush.msra.mxu0 0.0
    %264 = vmatpush.msra.mxu0 0.0
    %265 = vmatpush.msra.mxu0 0.0
    %266 = vmatpush.msra.mxu0 0.0
    %267 = vmatpush.msra.mxu0 0.0
    %268 = vmatpush.msra.mxu0 0.0
    %269 = vmatpush.msra.mxu0 0.0
    %270 = vmatpush.msra.mxu0 0.0
    %271 = vmatpush.msra.mxu0 0.0
    %272 = vmatpush.msra.mxu0 %v83
    %273 = vmatpush.msra.mxu0 %v82
    %274 = vmatpush.msra.mxu0 %v81
    %275 = vmatpush.msra.mxu0 %v80
    %276 = vmatmul.f32.gmra.mxu0 %v258
    %v277 = vpop.f32.mrf.mxu0
    %v278 = vadd.f32 0.0, %v277
    %279 = vdwg.mxu0
    %v280 = vadd.f32 %v257, %v278
    %v281 = vxor.u32 %v280, 2147483648
    %v282 = vmul.f32 %v281, 1.442695
    %v283 = vpow.pop %v282
    %v284 = vadd.f32 %v283, 1.0
    %v285 = vrcp.pop %v284
    %v286 = vmul.f32 %v284, %v285
    %v287 = vsub.f32 1.0, %v286
    %v288 = vmul.f32 %v285, %v287
    %v289 = vadd.f32 %v285, %v288
    %vm290 = vweird.f32 %v284
    %vm291 = vweird.f32 %v285
    %vm292 = vmor %vm290, %vm291
    %v293 = vsel %vm292, %v285, %v289
    %v294 = vand.u32 2147483647, %v284
    %vm295 = vcmp.eq.f32.partialorder %v294, 8.507059e+37
    %v296 = vand.u32 %v284, 2147483648
    %v297 = vor.u32 1.1754944e-38, %v296
    %v298 = vsel %vm295, %v297, %v293
    %v299 = vmul.f32 1.0, %v298
    %v300 = vtanh.pop %v280
    %v301 = vmul.f32 %v299, %v245
    %303 = vrot.lane.b32.xlu0 %v300, 64
    %v304 = vpop.permute.xlu0 %303
    %v306 = vmul.f32 %v299, %v304
    %308 = vrot.lane.b32.xlu0 %v306, 32
    %v309 = vpop.permute.xlu0 %308
    %v311 = vadd.f32 %v301, %v309
    %v312 = vtanh.pop %v311
    %314 = vrot.lane.b32.xlu0 %v312, 64
    %v315 = vpop.permute.xlu0 %314
    %v317 = vmul.f32 %v299, %v315
    %319 = vrot.lane.b32.xlu0 %v317, 32
    %v320 = vpop.permute.xlu0 %319
    %322 = vst.msk [vmem:[#allocation3 + $0x4] sm:$0x3] %vm189, %v320
    %v323 = vld [vmem:[#allocation2 + $0x6] sm:$0x3]
    %v324 = vsel %vm123, %v320, 0
    %326 = vmatpush.msra.mxu0 0.0
    %327 = vmatpush.msra.mxu0 0.0
    %328 = vmatpush.msra.mxu0 0.0
    %329 = vmatpush.msra.mxu0 0.0
    %330 = vmatpush.msra.mxu0 0.0
    %331 = vmatpush.msra.mxu0 0.0
    %332 = vmatpush.msra.mxu0 0.0
    %333 = vmatpush.msra.mxu0 0.0
    %334 = vmatpush.msra.mxu0 0.0
    %335 = vmatpush.msra.mxu0 0.0
    %336 = vmatpush.msra.mxu0 0.0
    %337 = vmatpush.msra.mxu0 0.0
    %338 = vmatpush.msra.mxu0 %v83
    %339 = vmatpush.msra.mxu0 %v82
    %340 = vmatpush.msra.mxu0 %v81
    %341 = vmatpush.msra.mxu0 %v80
    %342 = vmatmul.f32.gmra.mxu0 %v324
    %v343 = vpop.f32.mrf.mxu0
    %v344 = vadd.f32 0.0, %v343
    %345 = vdwg.mxu0
    %v346 = vadd.f32 %v323, %v344
    %v347 = vxor.u32 %v346, 2147483648
    %v348 = vmul.f32 %v347, 1.442695
    %v349 = vpow.pop %v348
    %v350 = vadd.f32 %v349, 1.0
    %v351 = vrcp.pop %v350
    %v352 = vmul.f32 %v350, %v351
    %v353 = vsub.f32 1.0, %v352
    %v354 = vmul.f32 %v351, %v353
    %v355 = vadd.f32 %v351, %v354
    %vm356 = vweird.f32 %v350
    %vm357 = vweird.f32 %v351
    %vm358 = vmor %vm356, %vm357
    %v359 = vsel %vm358, %v351, %v355
    %v360 = vand.u32 2147483647, %v350
    %vm361 = vcmp.eq.f32.partialorder %v360, 8.507059e+37
    %v362 = vand.u32 %v350, 2147483648
    %v363 = vor.u32 1.1754944e-38, %v362
    %v364 = vsel %vm361, %v363, %v359
    %v365 = vmul.f32 1.0, %v364
    %v366 = vtanh.pop %v346
    %v367 = vmul.f32 %v365, %v311
    %369 = vrot.lane.b32.xlu0 %v366, 64
    %v370 = vpop.permute.xlu0 %369
    %v372 = vmul.f32 %v365, %v370
    %374 = vrot.lane.b32.xlu0 %v372, 32
    %v375 = vpop.permute.xlu0 %374
    %v377 = vadd.f32 %v367, %v375
    %v378 = vtanh.pop %v377
    %380 = vrot.lane.b32.xlu0 %v378, 64
    %v381 = vpop.permute.xlu0 %380
    %v383 = vmul.f32 %v365, %v381
    %385 = vrot.lane.b32.xlu0 %v383, 32
    %v386 = vpop.permute.xlu0 %385
    %388 = vst.msk [vmem:[#allocation3 + $0x6] sm:$0x3] %vm189, %v386
    %v389 = vld [vmem:[#allocation2 + $0x8] sm:$0x3]
    %v390 = vsel %vm123, %v386, 0
    %392 = vmatpush.msra.mxu0 0.0
    %393 = vmatpush.msra.mxu0 0.0
    %394 = vmatpush.msra.mxu0 0.0
    %395 = vmatpush.msra.mxu0 0.0
    %396 = vmatpush.msra.mxu0 0.0
    %397 = vmatpush.msra.mxu0 0.0
    %398 = vmatpush.msra.mxu0 0.0
    %399 = vmatpush.msra.mxu0 0.0
    %400 = vmatpush.msra.mxu0 0.0
    %401 = vmatpush.msra.mxu0 0.0
    %402 = vmatpush.msra.mxu0 0.0
    %403 = vmatpush.msra.mxu0 0.0
    %404 = vmatpush.msra.mxu0 %v83
    %405 = vmatpush.msra.mxu0 %v82
    %406 = vmatpush.msra.mxu0 %v81
    %407 = vmatpush.msra.mxu0 %v80
    %408 = vmatmul.f32.gmra.mxu0 %v390
    %v409 = vpop.f32.mrf.mxu0
    %v410 = vadd.f32 0.0, %v409
    %411 = vdwg.mxu0
    %v412 = vadd.f32 %v389, %v410
    %v413 = vxor.u32 %v412, 2147483648
    %v414 = vmul.f32 %v413, 1.442695
    %v415 = vpow.pop %v414
    %v416 = vadd.f32 %v415, 1.0
    %v417 = vrcp.pop %v416
    %v418 = vmul.f32 %v416, %v417
    %v419 = vsub.f32 1.0, %v418
    %v420 = vmul.f32 %v417, %v419
    %v421 = vadd.f32 %v417, %v420
    %vm422 = vweird.f32 %v416
    %vm423 = vweird.f32 %v417
    %vm424 = vmor %vm422, %vm423
    %v425 = vsel %vm424, %v417, %v421
    %v426 = vand.u32 2147483647, %v416
    %vm427 = vcmp.eq.f32.partialorder %v426, 8.507059e+37
    %v428 = vand.u32 %v416, 2147483648
    %v429 = vor.u32 1.1754944e-38, %v428
    %v430 = vsel %vm427, %v429, %v425
    %v431 = vmul.f32 1.0, %v430
    %v432 = vtanh.pop %v412
    %v433 = vmul.f32 %v431, %v377
    %435 = vrot.lane.b32.xlu0 %v432, 64
    %v436 = vpop.permute.xlu0 %435
    %v438 = vmul.f32 %v431, %v436
    %440 = vrot.lane.b32.xlu0 %v438, 32
    %v441 = vpop.permute.xlu0 %440
    %v443 = vadd.f32 %v433, %v441
    %v444 = vtanh.pop %v443
    %446 = vrot.lane.b32.xlu0 %v444, 64
    %v447 = vpop.permute.xlu0 %446
    %v449 = vmul.f32 %v431, %v447
    %451 = vrot.lane.b32.xlu0 %v449, 32
    %v452 = vpop.permute.xlu0 %451
    %454 = vst.msk [vmem:[#allocation3 + $0x8] sm:$0x3] %vm189, %v452
    %v455 = vld [vmem:[#allocation2 + $0xa] sm:$0x3]
    %v456 = vsel %vm123, %v452, 0
    %458 = vmatpush.msra.mxu0 0.0
    %459 = vmatpush.msra.mxu0 0.0
    %460 = vmatpush.msra.mxu0 0.0
    %461 = vmatpush.msra.mxu0 0.0
    %462 = vmatpush.msra.mxu0 0.0
    %463 = vmatpush.msra.mxu0 0.0
    %464 = vmatpush.msra.mxu0 0.0
    %465 = vmatpush.msra.mxu0 0.0
    %466 = vmatpush.msra.mxu0 0.0
    %467 = vmatpush.msra.mxu0 0.0
    %468 = vmatpush.msra.mxu0 0.0
    %469 = vmatpush.msra.mxu0 0.0
    %470 = vmatpush.msra.mxu0 %v83
    %471 = vmatpush.msra.mxu0 %v82
    %472 = vmatpush.msra.mxu0 %v81
    %473 = vmatpush.msra.mxu0 %v80
    %474 = vmatmul.f32.gmra.mxu0 %v456
    %v475 = vpop.f32.mrf.mxu0
    %v476 = vadd.f32 0.0, %v475
    %477 = vdwg.mxu0
    %v478 = vadd.f32 %v455, %v476
    %v479 = vxor.u32 %v478, 2147483648
    %v480 = vmul.f32 %v479, 1.442695
    %v481 = vpow.pop %v480
    %v482 = vadd.f32 %v481, 1.0
    %v483 = vrcp.pop %v482
    %v484 = vmul.f32 %v482, %v483
    %v485 = vsub.f32 1.0, %v484
    %v486 = vmul.f32 %v483, %v485
    %v487 = vadd.f32 %v483, %v486
    %vm488 = vweird.f32 %v482
    %vm489 = vweird.f32 %v483
    %vm490 = vmor %vm488, %vm489
    %v491 = vsel %vm490, %v483, %v487
    %v492 = vand.u32 2147483647, %v482
    %vm493 = vcmp.eq.f32.partialorder %v492, 8.507059e+37
    %v494 = vand.u32 %v482, 2147483648
    %v495 = vor.u32 1.1754944e-38, %v494
    %v496 = vsel %vm493, %v495, %v491
    %v497 = vmul.f32 1.0, %v496
    %v498 = vtanh.pop %v478
    %v499 = vmul.f32 %v497, %v443
    %501 = vrot.lane.b32.xlu0 %v498, 64
    %v502 = vpop.permute.xlu0 %501
    %v504 = vmul.f32 %v497, %v502
    %506 = vrot.lane.b32.xlu0 %v504, 32
    %v507 = vpop.permute.xlu0 %506
    %v509 = vadd.f32 %v499, %v507
    %v510 = vtanh.pop %v509
    %512 = vrot.lane.b32.xlu0 %v510, 64
    %v513 = vpop.permute.xlu0 %512
    %v515 = vmul.f32 %v497, %v513
    %517 = vrot.lane.b32.xlu0 %v515, 32
    %v518 = vpop.permute.xlu0 %517
    %520 = vst.msk [vmem:[#allocation3 + $0xa] sm:$0x3] %vm189, %v518
    %v521 = vld [vmem:[#allocation2 + $0xc] sm:$0x3]
    %v522 = vsel %vm123, %v518, 0
    %524 = vmatpush.msra.mxu0 0.0
    %525 = vmatpush.msra.mxu0 0.0
    %526 = vmatpush.msra.mxu0 0.0
    %527 = vmatpush.msra.mxu0 0.0
    %528 = vmatpush.msra.mxu0 0.0
    %529 = vmatpush.msra.mxu0 0.0
    %530 = vmatpush.msra.mxu0 0.0
    %531 = vmatpush.msra.mxu0 0.0
    %532 = vmatpush.msra.mxu0 0.0
    %533 = vmatpush.msra.mxu0 0.0
    %534 = vmatpush.msra.mxu0 0.0
    %535 = vmatpush.msra.mxu0 0.0
    %536 = vmatpush.msra.mxu0 %v83
    %537 = vmatpush.msra.mxu0 %v82
    %538 = vmatpush.msra.mxu0 %v81
    %539 = vmatpush.msra.mxu0 %v80
    %540 = vmatmul.f32.gmra.mxu0 %v522
    %v541 = vpop.f32.mrf.mxu0
    %v542 = vadd.f32 0.0, %v541
    %543 = vdwg.mxu0
    %v544 = vadd.f32 %v521, %v542
    %v545 = vxor.u32 %v544, 2147483648
    %v546 = vmul.f32 %v545, 1.442695
    %v547 = vpow.pop %v546
    %v548 = vadd.f32 %v547, 1.0
    %v549 = vrcp.pop %v548
    %v550 = vmul.f32 %v548, %v549
    %v551 = vsub.f32 1.0, %v550
    %v552 = vmul.f32 %v549, %v551
    %v553 = vadd.f32 %v549, %v552
    %vm554 = vweird.f32 %v548
    %vm555 = vweird.f32 %v549
    %vm556 = vmor %vm554, %vm555
    %v557 = vsel %vm556, %v549, %v553
    %v558 = vand.u32 2147483647, %v548
    %vm559 = vcmp.eq.f32.partialorder %v558, 8.507059e+37
    %v560 = vand.u32 %v548, 2147483648
    %v561 = vor.u32 1.1754944e-38, %v560
    %v562 = vsel %vm559, %v561, %v557
    %v563 = vmul.f32 1.0, %v562
    %v564 = vtanh.pop %v544
    %v565 = vmul.f32 %v563, %v509
    %567 = vrot.lane.b32.xlu0 %v564, 64
    %v568 = vpop.permute.xlu0 %567
    %v570 = vmul.f32 %v563, %v568
    %572 = vrot.lane.b32.xlu0 %v570, 32
    %v573 = vpop.permute.xlu0 %572
    %v575 = vadd.f32 %v565, %v573
    %v576 = vtanh.pop %v575
    %578 = vrot.lane.b32.xlu0 %v576, 64
    %v579 = vpop.permute.xlu0 %578
    %v581 = vmul.f32 %v563, %v579
    %583 = vrot.lane.b32.xlu0 %v581, 32
    %v584 = vpop.permute.xlu0 %583
    %586 = vst.msk [vmem:[#allocation3 + $0xc] sm:$0x3] %vm189, %v584
    %v587 = vld [vmem:[#allocation2 + $0xe] sm:$0x3]
    %v588 = vsel %vm123, %v584, 0
    %590 = vmatpush.msra.mxu0 0.0
    %591 = vmatpush.msra.mxu0 0.0
    %592 = vmatpush.msra.mxu0 0.0
    %593 = vmatpush.msra.mxu0 0.0
    %594 = vmatpush.msra.mxu0 0.0
    %595 = vmatpush.msra.mxu0 0.0
    %596 = vmatpush.msra.mxu0 0.0
    %597 = vmatpush.msra.mxu0 0.0
    %598 = vmatpush.msra.mxu0 0.0
    %599 = vmatpush.msra.mxu0 0.0
    %600 = vmatpush.msra.mxu0 0.0
    %601 = vmatpush.msra.mxu0 0.0
    %602 = vmatpush.msra.mxu0 %v83
    %603 = vmatpush.msra.mxu0 %v82
    %604 = vmatpush.msra.mxu0 %v81
    %605 = vmatpush.msra.mxu0 %v80
    %606 = vmatmul.f32.gmra.mxu0 %v588
    %v607 = vpop.f32.mrf.mxu0
    %v608 = vadd.f32 0.0, %v607
    %609 = vdwg.mxu0
    %v610 = vadd.f32 %v587, %v608
    %v611 = vxor.u32 %v610, 2147483648
    %v612 = vmul.f32 %v611, 1.442695
    %v613 = vpow.pop %v612
    %v614 = vadd.f32 %v613, 1.0
    %v615 = vrcp.pop %v614
    %v616 = vmul.f32 %v614, %v615
    %v617 = vsub.f32 1.0, %v616
    %v618 = vmul.f32 %v615, %v617
    %v619 = vadd.f32 %v615, %v618
    %vm620 = vweird.f32 %v614
    %vm621 = vweird.f32 %v615
    %vm622 = vmor %vm620, %vm621
    %v623 = vsel %vm622, %v615, %v619
    %v624 = vand.u32 2147483647, %v614
    %vm625 = vcmp.eq.f32.partialorder %v624, 8.507059e+37
    %v626 = vand.u32 %v614, 2147483648
    %v627 = vor.u32 1.1754944e-38, %v626
    %v628 = vsel %vm625, %v627, %v623
    %v629 = vmul.f32 1.0, %v628
    %v630 = vtanh.pop %v610
    %v631 = vmul.f32 %v629, %v575
    %633 = vrot.lane.b32.xlu0 %v630, 64
    %v634 = vpop.permute.xlu0 %633
    %v636 = vmul.f32 %v629, %v634
    %638 = vrot.lane.b32.xlu0 %v636, 32
    %v639 = vpop.permute.xlu0 %638
    %v641 = vadd.f32 %v631, %v639
    %v642 = vtanh.pop %v641
    %644 = vrot.lane.b32.xlu0 %v642, 64
    %v645 = vpop.permute.xlu0 %644
    %v647 = vmul.f32 %v629, %v645
    %649 = vrot.lane.b32.xlu0 %v647, 32
    %v650 = vpop.permute.xlu0 %649
    %652 = vst.msk [vmem:[#allocation3 + $0xe] sm:$0x3] %vm189, %v650
    %v653 = vld [vmem:[%s4] sm:$0xff]
    %v654 = vld [vmem:[%s4 + $0x8] sm:$0xff]
    %v655 = vld [vmem:[%s4 + $0x10] sm:$0xff]
    %v656 = vld [vmem:[%s4 + $0x18] sm:$0xff]
    %v657 = vld [vmem:[#allocation7] sm:$0xff]
    %v658 = vld [vmem:[#allocation7 + $0x8] sm:$0xff]
    %v659 = vld [vmem:[#allocation7 + $0x10] sm:$0xff]
    %v660 = vld [vmem:[#allocation7 + $0x18] sm:$0xff]
    %v661 = vld [vmem:[%s6] sm:$0x1]
    %v662 = vld [vmem:[#allocation3] sm:$0xff]
    %v663 = vld [vmem:[#allocation3 + $0x8] sm:$0xff]
    %v665 = vperm.slane %v661, 0
    %v668 = vsel %vm123, %v662, 0
    %v671 = vsel %vm123, %v663, 0
    %673 = vmatpush.msra.mxu0 0.0
    %674 = vmatpush.msra.mxu0 0.0
    %675 = vmatpush.msra.mxu0 0.0
    %676 = vmatpush.msra.mxu0 0.0
    %677 = vmatpush.msra.mxu0 0.0
    %678 = vmatpush.msra.mxu0 0.0
    %679 = vmatpush.msra.mxu0 0.0
    %680 = vmatpush.msra.mxu0 0.0
    %681 = vmatpush.msra.mxu0 0.0
    %682 = vmatpush.msra.mxu0 0.0
    %683 = vmatpush.msra.mxu0 0.0
    %684 = vmatpush.msra.mxu0 0.0
    %685 = vmatpush.msra.mxu0 %v656
    %686 = vmatpush.msra.mxu0 %v655
    %687 = vmatpush.msra.mxu0 %v654
    %688 = vmatpush.msra.mxu0 %v653
    %689 = vmatmul.f32.gmra.mxu0 %v668
    %v690 = vpop.f32.mrf.mxu0
    %v691 = vadd.f32 %v665, %v690
    %692 = vmatmul.f32.gmra.mxu0 %v671
    %v693 = vpop.f32.mrf.mxu0
    %v694 = vadd.f32 %v665, %v693
    %695 = vdwg.mxu0
    %696 = vst [vmem:[#allocation2] sm:$0xff] %v691
    %697 = vst [vmem:[#allocation2 + $0x8] sm:$0xff] %v694
    %v698 = vld [vmem:[#allocation2] sm:$0x3]
    %699 = vmatpush.msra.mxu0 0.0
    %700 = vmatpush.msra.mxu0 0.0
    %701 = vmatpush.msra.mxu0 0.0
    %702 = vmatpush.msra.mxu0 0.0
    %703 = vmatpush.msra.mxu0 0.0
    %704 = vmatpush.msra.mxu0 0.0
    %705 = vmatpush.msra.mxu0 0.0
    %706 = vmatpush.msra.mxu0 0.0
    %707 = vmatpush.msra.mxu0 0.0
    %708 = vmatpush.msra.mxu0 0.0
    %709 = vmatpush.msra.mxu0 0.0
    %710 = vmatpush.msra.mxu0 0.0
    %711 = vmatpush.msra.mxu0 %v660
    %712 = vmatpush.msra.mxu0 %v659
    %713 = vmatpush.msra.mxu0 %v658
    %714 = vmatpush.msra.mxu0 %v657
    %715 = vmatmul.f32.gmra.mxu0 %v125
    %v716 = vpop.f32.mrf.mxu0
    %v717 = vadd.f32 0.0, %v716
    %718 = vdwg.mxu0
    %v719 = vadd.f32 %v698, %v717
    %v720 = vxor.u32 %v719, 2147483648
    %v721 = vmul.f32 %v720, 1.442695
    %v722 = vpow.pop %v721
    %v723 = vadd.f32 %v722, 1.0
    %v724 = vrcp.pop %v723
    %v725 = vmul.f32 %v723, %v724
    %v726 = vsub.f32 1.0, %v725
    %v727 = vmul.f32 %v724, %v726
    %v728 = vadd.f32 %v724, %v727
    %vm729 = vweird.f32 %v723
    %vm730 = vweird.f32 %v724
    %vm731 = vmor %vm729, %vm730
    %v732 = vsel %vm731, %v724, %v728
    %v733 = vand.u32 2147483647, %v723
    %vm734 = vcmp.eq.f32.partialorder %v733, 8.507059e+37
    %v735 = vand.u32 %v723, 2147483648
    %v736 = vor.u32 1.1754944e-38, %v735
    %v737 = vsel %vm734, %v736, %v732
    %v738 = vmul.f32 1.0, %v737
    %v739 = vtanh.pop %v719
    %v740 = vmul.f32 %v738, 0.0
    %742 = vrot.lane.b32.xlu0 %v739, 64
    %v743 = vpop.permute.xlu0 %742
    %v745 = vmul.f32 %v738, %v743
    %747 = vrot.lane.b32.xlu0 %v745, 32
    %v748 = vpop.permute.xlu0 %747
    %v750 = vadd.f32 %v740, %v748
    %v751 = vtanh.pop %v750
    %753 = vrot.lane.b32.xlu0 %v751, 64
    %v754 = vpop.permute.xlu0 %753
    %v756 = vmul.f32 %v738, %v754
    %v757 = vld [vmem:[#allocation2 + $0x2] sm:$0x3]
    %759 = vrot.lane.b32.xlu0 %v756, 32
    %v760 = vpop.permute.xlu0 %759
    %v761 = vsel %vm123, %v760, 0
    %763 = vmatpush.msra.mxu0 0.0
    %764 = vmatpush.msra.mxu0 0.0
    %765 = vmatpush.msra.mxu0 0.0
    %766 = vmatpush.msra.mxu0 0.0
    %767 = vmatpush.msra.mxu0 0.0
    %768 = vmatpush.msra.mxu0 0.0
    %769 = vmatpush.msra.mxu0 0.0
    %770 = vmatpush.msra.mxu0 0.0
    %771 = vmatpush.msra.mxu0 0.0
    %772 = vmatpush.msra.mxu0 0.0
    %773 = vmatpush.msra.mxu0 0.0
    %774 = vmatpush.msra.mxu0 0.0
    %775 = vmatpush.msra.mxu0 %v660
    %776 = vmatpush.msra.mxu0 %v659
    %777 = vmatpush.msra.mxu0 %v658
    %778 = vmatpush.msra.mxu0 %v657
    %779 = vmatmul.f32.gmra.mxu0 %v761
    %v780 = vpop.f32.mrf.mxu0
    %v781 = vadd.f32 0.0, %v780
    %782 = vdwg.mxu0
    %v783 = vadd.f32 %v757, %v781
    %v784 = vxor.u32 %v783, 2147483648
    %v785 = vmul.f32 %v784, 1.442695
    %v786 = vpow.pop %v785
    %v787 = vadd.f32 %v786, 1.0
    %v788 = vrcp.pop %v787
    %v789 = vmul.f32 %v787, %v788
    %v790 = vsub.f32 1.0, %v789
    %v791 = vmul.f32 %v788, %v790
    %v792 = vadd.f32 %v788, %v791
    %vm793 = vweird.f32 %v787
    %vm794 = vweird.f32 %v788
    %vm795 = vmor %vm793, %vm794
    %v796 = vsel %vm795, %v788, %v792
    %v797 = vand.u32 2147483647, %v787
    %vm798 = vcmp.eq.f32.partialorder %v797, 8.507059e+37
    %v799 = vand.u32 %v787, 2147483648
    %v800 = vor.u32 1.1754944e-38, %v799
    %v801 = vsel %vm798, %v800, %v796
    %v802 = vmul.f32 1.0, %v801
    %v803 = vtanh.pop %v783
    %v804 = vmul.f32 %v802, %v750
    %806 = vrot.lane.b32.xlu0 %v803, 64
    %v807 = vpop.permute.xlu0 %806
    %v809 = vmul.f32 %v802, %v807
    %811 = vrot.lane.b32.xlu0 %v809, 32
    %v812 = vpop.permute.xlu0 %811
    %v814 = vadd.f32 %v804, %v812
    %v815 = vtanh.pop %v814
    %817 = vrot.lane.b32.xlu0 %v815, 64
    %v818 = vpop.permute.xlu0 %817
    %v820 = vmul.f32 %v802, %v818
    %v821 = vld [vmem:[#allocation2 + $0x4] sm:$0x3]
    %823 = vrot.lane.b32.xlu0 %v820, 32
    %v824 = vpop.permute.xlu0 %823
    %v825 = vsel %vm123, %v824, 0
    %827 = vmatpush.msra.mxu0 0.0
    %828 = vmatpush.msra.mxu0 0.0
    %829 = vmatpush.msra.mxu0 0.0
    %830 = vmatpush.msra.mxu0 0.0
    %831 = vmatpush.msra.mxu0 0.0
    %832 = vmatpush.msra.mxu0 0.0
    %833 = vmatpush.msra.mxu0 0.0
    %834 = vmatpush.msra.mxu0 0.0
    %835 = vmatpush.msra.mxu0 0.0
    %836 = vmatpush.msra.mxu0 0.0
    %837 = vmatpush.msra.mxu0 0.0
    %838 = vmatpush.msra.mxu0 0.0
    %839 = vmatpush.msra.mxu0 %v660
    %840 = vmatpush.msra.mxu0 %v659
    %841 = vmatpush.msra.mxu0 %v658
    %842 = vmatpush.msra.mxu0 %v657
    %843 = vmatmul.f32.gmra.mxu0 %v825
    %v844 = vpop.f32.mrf.mxu0
    %v845 = vadd.f32 0.0, %v844
    %846 = vdwg.mxu0
    %v847 = vadd.f32 %v821, %v845
    %v848 = vxor.u32 %v847, 2147483648
    %v849 = vmul.f32 %v848, 1.442695
    %v850 = vpow.pop %v849
    %v851 = vadd.f32 %v850, 1.0
    %v852 = vrcp.pop %v851
    %v853 = vmul.f32 %v851, %v852
    %v854 = vsub.f32 1.0, %v853
    %v855 = vmul.f32 %v852, %v854
    %v856 = vadd.f32 %v852, %v855
    %vm857 = vweird.f32 %v851
    %vm858 = vweird.f32 %v852
    %vm859 = vmor %vm857, %vm858
    %v860 = vsel %vm859, %v852, %v856
    %v861 = vand.u32 2147483647, %v851
    %vm862 = vcmp.eq.f32.partialorder %v861, 8.507059e+37
    %v863 = vand.u32 %v851, 2147483648
    %v864 = vor.u32 1.1754944e-38, %v863
    %v865 = vsel %vm862, %v864, %v860
    %v866 = vmul.f32 1.0, %v865
    %v867 = vtanh.pop %v847
    %v868 = vmul.f32 %v866, %v814
    %870 = vrot.lane.b32.xlu0 %v867, 64
    %v871 = vpop.permute.xlu0 %870
    %v873 = vmul.f32 %v866, %v871
    %875 = vrot.lane.b32.xlu0 %v873, 32
    %v876 = vpop.permute.xlu0 %875
    %v878 = vadd.f32 %v868, %v876
    %v879 = vtanh.pop %v878
    %881 = vrot.lane.b32.xlu0 %v879, 64
    %v882 = vpop.permute.xlu0 %881
    %v884 = vmul.f32 %v866, %v882
    %v885 = vld [vmem:[#allocation2 + $0x6] sm:$0x3]
    %887 = vrot.lane.b32.xlu0 %v884, 32
    %v888 = vpop.permute.xlu0 %887
    %v889 = vsel %vm123, %v888, 0
    %891 = vmatpush.msra.mxu0 0.0
    %892 = vmatpush.msra.mxu0 0.0
    %893 = vmatpush.msra.mxu0 0.0
    %894 = vmatpush.msra.mxu0 0.0
    %895 = vmatpush.msra.mxu0 0.0
    %896 = vmatpush.msra.mxu0 0.0
    %897 = vmatpush.msra.mxu0 0.0
    %898 = vmatpush.msra.mxu0 0.0
    %899 = vmatpush.msra.mxu0 0.0
    %900 = vmatpush.msra.mxu0 0.0
    %901 = vmatpush.msra.mxu0 0.0
    %902 = vmatpush.msra.mxu0 0.0
    %903 = vmatpush.msra.mxu0 %v660
    %904 = vmatpush.msra.mxu0 %v659
    %905 = vmatpush.msra.mxu0 %v658
    %906 = vmatpush.msra.mxu0 %v657
    %907 = vmatmul.f32.gmra.mxu0 %v889
    %v908 = vpop.f32.mrf.mxu0
    %v909 = vadd.f32 0.0, %v908
    %910 = vdwg.mxu0
    %v911 = vadd.f32 %v885, %v909
    %v912 = vxor.u32 %v911, 2147483648
    %v913 = vmul.f32 %v912, 1.442695
    %v914 = vpow.pop %v913
    %v915 = vadd.f32 %v914, 1.0
    %v916 = vrcp.pop %v915
    %v917 = vmul.f32 %v915, %v916
    %v918 = vsub.f32 1.0, %v917
    %v919 = vmul.f32 %v916, %v918
    %v920 = vadd.f32 %v916, %v919
    %vm921 = vweird.f32 %v915
    %vm922 = vweird.f32 %v916
    %vm923 = vmor %vm921, %vm922
    %v924 = vsel %vm923, %v916, %v920
    %v925 = vand.u32 2147483647, %v915
    %vm926 = vcmp.eq.f32.partialorder %v925, 8.507059e+37
    %v927 = vand.u32 %v915, 2147483648
    %v928 = vor.u32 1.1754944e-38, %v927
    %v929 = vsel %vm926, %v928, %v924
    %v930 = vmul.f32 1.0, %v929
    %v931 = vtanh.pop %v911
    %v932 = vmul.f32 %v930, %v878
    %934 = vrot.lane.b32.xlu0 %v931, 64
    %v935 = vpop.permute.xlu0 %934
    %v937 = vmul.f32 %v930, %v935
    %939 = vrot.lane.b32.xlu0 %v937, 32
    %v940 = vpop.permute.xlu0 %939
    %v942 = vadd.f32 %v932, %v940
    %v943 = vtanh.pop %v942
    %945 = vrot.lane.b32.xlu0 %v943, 64
    %v946 = vpop.permute.xlu0 %945
    %v948 = vmul.f32 %v930, %v946
    %v949 = vld [vmem:[#allocation2 + $0x8] sm:$0x3]
    %951 = vrot.lane.b32.xlu0 %v948, 32
    %v952 = vpop.permute.xlu0 %951
    %v953 = vsel %vm123, %v952, 0
    %955 = vmatpush.msra.mxu0 0.0
    %956 = vmatpush.msra.mxu0 0.0
    %957 = vmatpush.msra.mxu0 0.0
    %958 = vmatpush.msra.mxu0 0.0
    %959 = vmatpush.msra.mxu0 0.0
    %960 = vmatpush.msra.mxu0 0.0
    %961 = vmatpush.msra.mxu0 0.0
    %962 = vmatpush.msra.mxu0 0.0
    %963 = vmatpush.msra.mxu0 0.0
    %964 = vmatpush.msra.mxu0 0.0
    %965 = vmatpush.msra.mxu0 0.0
    %966 = vmatpush.msra.mxu0 0.0
    %967 = vmatpush.msra.mxu0 %v660
    %968 = vmatpush.msra.mxu0 %v659
    %969 = vmatpush.msra.mxu0 %v658
    %970 = vmatpush.msra.mxu0 %v657
    %971 = vmatmul.f32.gmra.mxu0 %v953
    %v972 = vpop.f32.mrf.mxu0
    %v973 = vadd.f32 0.0, %v972
    %974 = vdwg.mxu0
    %v975 = vadd.f32 %v949, %v973
    %v976 = vxor.u32 %v975, 2147483648
    %v977 = vmul.f32 %v976, 1.442695
    %v978 = vpow.pop %v977
    %v979 = vadd.f32 %v978, 1.0
    %v980 = vrcp.pop %v979
    %v981 = vmul.f32 %v979, %v980
    %v982 = vsub.f32 1.0, %v981
    %v983 = vmul.f32 %v980, %v982
    %v984 = vadd.f32 %v980, %v983
    %vm985 = vweird.f32 %v979
    %vm986 = vweird.f32 %v980
    %vm987 = vmor %vm985, %vm986
    %v988 = vsel %vm987, %v980, %v984
    %v989 = vand.u32 2147483647, %v979
    %vm990 = vcmp.eq.f32.partialorder %v989, 8.507059e+37
    %v991 = vand.u32 %v979, 2147483648
    %v992 = vor.u32 1.1754944e-38, %v991
    %v993 = vsel %vm990, %v992, %v988
    %v994 = vmul.f32 1.0, %v993
    %v995 = vtanh.pop %v975
    %v996 = vmul.f32 %v994, %v942
    %998 = vrot.lane.b32.xlu0 %v995, 64
    %v999 = vpop.permute.xlu0 %998
    %v1001 = vmul.f32 %v994, %v999
    %1003 = vrot.lane.b32.xlu0 %v1001, 32
    %v1004 = vpop.permute.xlu0 %1003
    %v1006 = vadd.f32 %v996, %v1004
    %v1007 = vtanh.pop %v1006
    %1009 = vrot.lane.b32.xlu0 %v1007, 64
    %v1010 = vpop.permute.xlu0 %1009
    %v1012 = vmul.f32 %v994, %v1010
    %v1013 = vld [vmem:[#allocation2 + $0xa] sm:$0x3]
    %1015 = vrot.lane.b32.xlu0 %v1012, 32
    %v1016 = vpop.permute.xlu0 %1015
    %v1017 = vsel %vm123, %v1016, 0
    %1019 = vmatpush.msra.mxu0 0.0
    %1020 = vmatpush.msra.mxu0 0.0
    %1021 = vmatpush.msra.mxu0 0.0
    %1022 = vmatpush.msra.mxu0 0.0
    %1023 = vmatpush.msra.mxu0 0.0
    %1024 = vmatpush.msra.mxu0 0.0
    %1025 = vmatpush.msra.mxu0 0.0
    %1026 = vmatpush.msra.mxu0 0.0
    %1027 = vmatpush.msra.mxu0 0.0
    %1028 = vmatpush.msra.mxu0 0.0
    %1029 = vmatpush.msra.mxu0 0.0
    %1030 = vmatpush.msra.mxu0 0.0
    %1031 = vmatpush.msra.mxu0 %v660
    %1032 = vmatpush.msra.mxu0 %v659
    %1033 = vmatpush.msra.mxu0 %v658
    %1034 = vmatpush.msra.mxu0 %v657
    %1035 = vmatmul.f32.gmra.mxu0 %v1017
    %v1036 = vpop.f32.mrf.mxu0
    %v1037 = vadd.f32 0.0, %v1036
    %1038 = vdwg.mxu0
    %v1039 = vadd.f32 %v1013, %v1037
    %v1040 = vxor.u32 %v1039, 2147483648
    %v1041 = vmul.f32 %v1040, 1.442695
    %v1042 = vpow.pop %v1041
    %v1043 = vadd.f32 %v1042, 1.0
    %v1044 = vrcp.pop %v1043
    %v1045 = vmul.f32 %v1043, %v1044
    %v1046 = vsub.f32 1.0, %v1045
    %v1047 = vmul.f32 %v1044, %v1046
    %v1048 = vadd.f32 %v1044, %v1047
    %vm1049 = vweird.f32 %v1043
    %vm1050 = vweird.f32 %v1044
    %vm1051 = vmor %vm1049, %vm1050
    %v1052 = vsel %vm1051, %v1044, %v1048
    %v1053 = vand.u32 2147483647, %v1043
    %vm1054 = vcmp.eq.f32.partialorder %v1053, 8.507059e+37
    %v1055 = vand.u32 %v1043, 2147483648
    %v1056 = vor.u32 1.1754944e-38, %v1055
    %v1057 = vsel %vm1054, %v1056, %v1052
    %v1058 = vmul.f32 1.0, %v1057
    %v1059 = vtanh.pop %v1039
    %v1060 = vmul.f32 %v1058, %v1006
    %1062 = vrot.lane.b32.xlu0 %v1059, 64
    %v1063 = vpop.permute.xlu0 %1062
    %v1065 = vmul.f32 %v1058, %v1063
    %1067 = vrot.lane.b32.xlu0 %v1065, 32
    %v1068 = vpop.permute.xlu0 %1067
    %v1070 = vadd.f32 %v1060, %v1068
    %v1071 = vtanh.pop %v1070
    %1073 = vrot.lane.b32.xlu0 %v1071, 64
    %v1074 = vpop.permute.xlu0 %1073
    %v1076 = vmul.f32 %v1058, %v1074
    %v1077 = vld [vmem:[#allocation2 + $0xc] sm:$0x3]
    %1079 = vrot.lane.b32.xlu0 %v1076, 32
    %v1080 = vpop.permute.xlu0 %1079
    %v1081 = vsel %vm123, %v1080, 0
    %1083 = vmatpush.msra.mxu0 0.0
    %1084 = vmatpush.msra.mxu0 0.0
    %1085 = vmatpush.msra.mxu0 0.0
    %1086 = vmatpush.msra.mxu0 0.0
    %1087 = vmatpush.msra.mxu0 0.0
    %1088 = vmatpush.msra.mxu0 0.0
    %1089 = vmatpush.msra.mxu0 0.0
    %1090 = vmatpush.msra.mxu0 0.0
    %1091 = vmatpush.msra.mxu0 0.0
    %1092 = vmatpush.msra.mxu0 0.0
    %1093 = vmatpush.msra.mxu0 0.0
    %1094 = vmatpush.msra.mxu0 0.0
    %1095 = vmatpush.msra.mxu0 %v660
    %1096 = vmatpush.msra.mxu0 %v659
    %1097 = vmatpush.msra.mxu0 %v658
    %1098 = vmatpush.msra.mxu0 %v657
    %1099 = vmatmul.f32.gmra.mxu0 %v1081
    %v1100 = vpop.f32.mrf.mxu0
    %v1101 = vadd.f32 0.0, %v1100
    %1102 = vdwg.mxu0
    %v1103 = vadd.f32 %v1077, %v1101
    %v1104 = vxor.u32 %v1103, 2147483648
    %v1105 = vmul.f32 %v1104, 1.442695
    %v1106 = vpow.pop %v1105
    %v1107 = vadd.f32 %v1106, 1.0
    %v1108 = vrcp.pop %v1107
    %v1109 = vmul.f32 %v1107, %v1108
    %v1110 = vsub.f32 1.0, %v1109
    %v1111 = vmul.f32 %v1108, %v1110
    %v1112 = vadd.f32 %v1108, %v1111
    %vm1113 = vweird.f32 %v1107
    %vm1114 = vweird.f32 %v1108
    %vm1115 = vmor %vm1113, %vm1114
    %v1116 = vsel %vm1115, %v1108, %v1112
    %v1117 = vand.u32 2147483647, %v1107
    %vm1118 = vcmp.eq.f32.partialorder %v1117, 8.507059e+37
    %v1119 = vand.u32 %v1107, 2147483648
    %v1120 = vor.u32 1.1754944e-38, %v1119
    %v1121 = vsel %vm1118, %v1120, %v1116
    %v1122 = vmul.f32 1.0, %v1121
    %v1123 = vtanh.pop %v1103
    %v1124 = vmul.f32 %v1122, %v1070
    %1126 = vrot.lane.b32.xlu0 %v1123, 64
    %v1127 = vpop.permute.xlu0 %1126
    %v1129 = vmul.f32 %v1122, %v1127
    %1131 = vrot.lane.b32.xlu0 %v1129, 32
    %v1132 = vpop.permute.xlu0 %1131
    %v1134 = vadd.f32 %v1124, %v1132
    %v1135 = vtanh.pop %v1134
    %1137 = vrot.lane.b32.xlu0 %v1135, 64
    %v1138 = vpop.permute.xlu0 %1137
    %v1140 = vmul.f32 %v1122, %v1138
    %v1141 = vld [vmem:[#allocation2 + $0xe] sm:$0x3]
    %1143 = vrot.lane.b32.xlu0 %v1140, 32
    %v1144 = vpop.permute.xlu0 %1143
    %v1145 = vsel %vm123, %v1144, 0
    %1147 = vmatpush.msra.mxu0 0.0
    %1148 = vmatpush.msra.mxu0 0.0
    %1149 = vmatpush.msra.mxu0 0.0
    %1150 = vmatpush.msra.mxu0 0.0
    %1151 = vmatpush.msra.mxu0 0.0
    %1152 = vmatpush.msra.mxu0 0.0
    %1153 = vmatpush.msra.mxu0 0.0
    %1154 = vmatpush.msra.mxu0 0.0
    %1155 = vmatpush.msra.mxu0 0.0
    %1156 = vmatpush.msra.mxu0 0.0
    %1157 = vmatpush.msra.mxu0 0.0
    %1158 = vmatpush.msra.mxu0 0.0
    %1159 = vmatpush.msra.mxu0 %v660
    %1160 = vmatpush.msra.mxu0 %v659
    %1161 = vmatpush.msra.mxu0 %v658
    %1162 = vmatpush.msra.mxu0 %v657
    %1163 = vmatmul.f32.gmra.mxu0 %v1145
    %v1164 = vpop.f32.mrf.mxu0
    %v1165 = vadd.f32 0.0, %v1164
    %1166 = vdwg.mxu0
    %v1167 = vadd.f32 %v1141, %v1165
    %v1168 = vxor.u32 %v1167, 2147483648
    %v1169 = vmul.f32 %v1168, 1.442695
    %v1170 = vpow.pop %v1169
    %v1171 = vadd.f32 %v1170, 1.0
    %v1172 = vrcp.pop %v1171
    %v1173 = vmul.f32 %v1171, %v1172
    %v1174 = vsub.f32 1.0, %v1173
    %v1175 = vmul.f32 %v1172, %v1174
    %v1176 = vadd.f32 %v1172, %v1175
    %vm1177 = vweird.f32 %v1171
    %vm1178 = vweird.f32 %v1172
    %vm1179 = vmor %vm1177, %vm1178
    %v1180 = vsel %vm1179, %v1172, %v1176
    %v1181 = vand.u32 2147483647, %v1171
    %vm1182 = vcmp.eq.f32.partialorder %v1181, 8.507059e+37
    %v1183 = vand.u32 %v1171, 2147483648
    %v1184 = vor.u32 1.1754944e-38, %v1183
    %v1185 = vsel %vm1182, %v1184, %v1180
    %v1186 = vmul.f32 1.0, %v1185
    %v1187 = vtanh.pop %v1167
    %v1188 = vmul.f32 %v1186, %v1134
    %1190 = vrot.lane.b32.xlu0 %v1187, 64
    %v1191 = vpop.permute.xlu0 %1190
    %v1193 = vmul.f32 %v1186, %v1191
    %1195 = vrot.lane.b32.xlu0 %v1193, 32
    %v1196 = vpop.permute.xlu0 %1195
    %v1198 = vadd.f32 %v1188, %v1196
    %v1199 = vtanh.pop %v1198
    %1201 = vrot.lane.b32.xlu0 %v1199, 64
    %v1202 = vpop.permute.xlu0 %1201
    %v1204 = vmul.f32 %v1186, %v1202
    %v1205 = vld [vmem:[%s7] sm:$0xff]
    %v1206 = vld [vmem:[%s7 + $0x8] sm:$0xff]
    %v1207 = vld [vmem:[%s7 + $0x10] sm:$0xff]
    %v1208 = vld [vmem:[%s7 + $0x18] sm:$0xff]
    %v1209 = vld [vmem:[#allocation9] sm:$0x1]
    %v1211 = vperm.slane %v1209, 0
    %1214 = vrot.lane.b32.xlu0 %v1204, 32
    %v1215 = vpop.permute.xlu0 %1214
    %v1216 = vsel %vm123, %v1215, 0
    %1218 = vmatpush.msra.mxu0 0.0
    %1219 = vmatpush.msra.mxu0 0.0
    %1220 = vmatpush.msra.mxu0 0.0
    %1221 = vmatpush.msra.mxu0 0.0
    %1222 = vmatpush.msra.mxu0 0.0
    %1223 = vmatpush.msra.mxu0 0.0
    %1224 = vmatpush.msra.mxu0 0.0
    %1225 = vmatpush.msra.mxu0 0.0
    %1226 = vmatpush.msra.mxu0 0.0
    %1227 = vmatpush.msra.mxu0 0.0
    %1228 = vmatpush.msra.mxu0 0.0
    %1229 = vmatpush.msra.mxu0 0.0
    %1230 = vmatpush.msra.mxu0 %v1208
    %1231 = vmatpush.msra.mxu0 %v1207
    %1232 = vmatpush.msra.mxu0 %v1206
    %1233 = vmatpush.msra.mxu0 %v1205
    %1234 = vmatmul.f32.gmra.mxu0 %v1216
    %v1235 = vpop.f32.mrf.mxu0
    %v1236 = vadd.f32 %v1211, %v1235
    %1237 = vdwg.mxu0
    %vm1238 = vcmask 58368
    %1239 = vst.msk [vmem:[#allocation10] sm:$0x3] %vm1238, %v1236
    // Predicated region
    $region50: #{task_config_forward.1} parent=1 // pred_check
      _
    $region51: #{task_config_forward.1} parent=1 // pred_check_branch
      %1241 = sbr.rel (0) target = $region53
    $region52: #{task_config_forward.1} parent=1 // pred_region
      %1243 = vsyncadd [#allocation6], 0
      %s1245 = sshll.u32 [#allocation10], 4
      %s1246 = int_to_ptr.vmem [resolvable:$true] %s1245
      %s1247 = sshll.u32 %s9, 4
      %s1248 = int_to_ptr.hbm [resolvable:$true] %s1247
      %1250 = dma.vmem_to_hbm [thread:$0]  %s1246, 32, %s1248, [#allocation6]
    $region53: #{task_config_forward.1} parent=1 // pred_fallthru
      _
    // Predicated region
    $region54: #{task_config_forward.1} parent=1 // pred_check
      _
    $region55: #{task_config_forward.1} parent=1 // pred_check_branch
      %1252 = sbr.rel (0) target = $region57
    $region56: #{task_config_forward.1} parent=1 // pred_region
      %1254 = dma.done [#allocation6], 32
    $region57: #{task_config_forward.1} parent=1 // pred_fallthru
      _
    %1255 = vsyncpa [#allocation5], 1
    %1256 = vsyncpa [#allocation8], 1
    %1257 = vsyncpa [#allocation6], 1

</llo_original>
